<compile_context>
chip_gen: v7x
topology: tpu7x:2x2x1
jax: 0.10.0
libtpu: 0.0.40
codegen_flags: <defaults>
</compile_context>

<pallas_src>
import numpy as np
import jax
import jax.numpy as jnp
from jax import lax
from jax.experimental import pallas as pl
from jax.experimental.pallas import tpu as pltpu

PROJ = 300       # projection_layer{1,2,3}: nn.Linear(state_dim, 300)
PROJ_PAD = 384   # 300 padded to 3 * 128 lanes (zero pad -> exact result)


def semantic_kernel(true_len_ref,                   # scalar prefetch (SMEM), (B,)
                    nodes_ref, edges_ref, adj_ref,  # per (b, seq-block) tiles
                    w13_ref, w2_ref, bcomb_ref,     # resident weights
                    sum_ref, cnt_ref):              # per-batch accumulators
    b = pl.program_id(0)
    sb = pl.program_id(1)

    @pl.when(sb == 0)
    def _():
        sum_ref[...] = jnp.zeros_like(sum_ref)
        cnt_ref[...] = jnp.zeros_like(cnt_ref)

    _, s_blk, n_nodes, e_div_n, _ = adj_ref.shape   # adj block: (1, S_BLK, N, E//N, N)
    pp = w2_ref.shape[1]                            # padded projection dim (384)
    tl = true_len_ref[b]
    s0 = sb * s_blk

    # Skip blocks that lie entirely past this batch element's true length.
    @pl.when(s0 < tl)
    def _():
        nodes = nodes_ref[0]                        # (S_BLK*N, D) bf16
        edges = edges_ref[0]                        # (S_BLK*E, D) bf16

        # One MXU matmul for proj1+proj3 (fused weights), one for proj2.
        p13 = jnp.dot(nodes, w13_ref[...], preferred_element_type=jnp.float32)
        p2f = jnp.dot(edges, w2_ref[...], preferred_element_type=jnp.float32)

        # Pair index j = j1 * N + j2  (j1 = j // N, j2 = j % N).
        #   f_i  depends on node i            -> (s, N, 1, 1, P)
        #   f_j  depends on node j % N        -> (s, 1, 1, N, P)
        #   f_ij depends on edge j            -> (s, 1, E//N, N, P)
        p1 = p13[:, :pp].reshape(s_blk, n_nodes, 1, 1, pp)
        p3 = p13[:, pp:].reshape(s_blk, 1, 1, n_nodes, pp)
        p2 = p2f.reshape(s_blk, 1, e_div_n, n_nodes, pp)

        # diff = f_j - f_ij - f_i with all biases folded into bcomb = b3-b2-b1.
        diff = (p3 - p2 + bcomb_ref[...]) - p1          # (s, N, E//N, N, P)
        per_pair = jnp.sum(diff * diff, axis=-1) * (1.0 / PROJ)   # (s, N, E//N, N)

        seq_idx = s0 + lax.broadcasted_iota(jnp.int32, per_pair.shape, 0)
        valid = jnp.logical_and(adj_ref[0] == 1, seq_idx < tl)

        sum_ref[...] = sum_ref[...] + jnp.sum(jnp.where(valid, per_pair, 0.0))
        cnt_ref[...] = cnt_ref[...] + jnp.sum(
            jnp.where(jnp.logical_and(valid, per_pair > 0.0), 1.0, 0.0))


def _choose_seq_block(S, N, E, D):
    """Largest seq-block that keeps per-step VMEM comfortably bounded."""
    budget = 24 << 20   # safe under the default scoped VMEM limit, incl. v7x (64 MiB)

    def blk_bytes(sb):
        return (2 * sb * (N + E) * D * 2          # nodes+edges bf16, double-buffered
                + 2 * sb * N * E * 4              # adj int32, double-buffered
                + sb * N * E * PROJ_PAD * 4)      # f32 diff intermediate

    candidates = [sb for sb in range(1, S + 1)
                  if S % sb == 0 and
                  (sb == S or ((sb * N) % 8 == 0 and (sb * E) % 8 == 0))]
    fitting = [sb for sb in candidates if blk_bytes(sb) <= budget]
    return max(fitting) if fitting else min(candidates)


def semantic_loss(nodes_feats, edges_feats, adj_mat, true_lengths, params,
                  seq_size, compute_dtype=jnp.bfloat16):
    w1, b1, w2, b2, w3, b3 = params
    batseq, N, D = nodes_feats.shape
    _, E, _ = edges_feats.shape
    B = batseq // seq_size
    S = seq_size
    # The reference indexing node_feat[(j - i*N) % N] == node_feat[j % N].
    assert E % N == 0  # TODO(synk): general E would need an in-kernel gather.

    pad = PROJ_PAD - PROJ

    def pad_cols(x):
        return jnp.pad(jnp.asarray(x, jnp.float32), ((0, 0), (0, pad)))

    # proj1 & proj3 share the node features -> fuse into one (D, 2*PROJ_PAD) weight.
    w13 = jnp.concatenate([pad_cols(w1), pad_cols(w3)], axis=1).astype(compute_dtype)
    w2p = pad_cols(w2).astype(compute_dtype)
    bcomb = pad_cols(b3 - b2 - b1)                       # f32, (1, PROJ_PAD)

    nodes = nodes_feats.reshape(B, S * N, D).astype(compute_dtype)
    edges = edges_feats.reshape(B, S * E, D).astype(compute_dtype)
    adj = adj_mat.reshape(B, S, N, E // N, N).astype(jnp.int32)

    S_BLK = _choose_seq_block(S, N, E, D)
    grid = (B, S // S_BLK)

    grid_spec = pltpu.PrefetchScalarGridSpec(
        num_scalar_prefetch=1,
        grid=grid,
        in_specs=[
            pl.BlockSpec((1, S_BLK * N, D), lambda b, sb, tl: (b, sb, 0)),          # nodes
            pl.BlockSpec((1, S_BLK * E, D), lambda b, sb, tl: (b, sb, 0)),          # edges
            pl.BlockSpec((1, S_BLK, N, E // N, N),
                         lambda b, sb, tl: (b, sb, 0, 0, 0)),                       # adj
            pl.BlockSpec((D, 2 * PROJ_PAD), lambda b, sb, tl: (0, 0)),              # w1|w3
            pl.BlockSpec((D, PROJ_PAD), lambda b, sb, tl: (0, 0)),                  # w2
            pl.BlockSpec((1, PROJ_PAD), lambda b, sb, tl: (0, 0)),                  # b3-b2-b1
        ],
        out_specs=[
            pl.BlockSpec((1, 1, 1), lambda b, sb, tl: (b, 0, 0)),                   # per-b sum
            pl.BlockSpec((1, 1, 1), lambda b, sb, tl: (b, 0, 0)),                   # per-b count
        ],
    )

    sums, cnts = pl.pallas_call(
        semantic_kernel,
        out_shape=(jax.ShapeDtypeStruct((B, 1, 1), jnp.float32),
                   jax.ShapeDtypeStruct((B, 1, 1), jnp.float32)),
        grid_spec=grid_spec,
        compiler_params=pltpu.CompilerParams(
            dimension_semantics=("parallel", "arbitrary")),
    )(jnp.asarray(true_lengths, jnp.int32), nodes, edges, adj, w13, w2p, bcomb)

    # Final reduction / divide outside the kernel (NaN if no pair selected,
    # matching the reference's losses.sum() / 0 behaviour).
    return jnp.sum(sums) / jnp.sum(cnts)


def reference_loss(nodes_feats, edges_feats, adj_mat, true_lengths, params, seq_size):
    """Pure-numpy reference matching the (intended) PyTorch semantics."""
    w1, b1, w2, b2, w3, b3 = [np.asarray(p, np.float64) for p in params]
    nodes = np.asarray(nodes_feats, np.float64)
    edges = np.asarray(edges_feats, np.float64)
    adj = np.asarray(adj_mat)
    batseq, N, D = nodes.shape
    _, E, _ = edges.shape
    B = batseq // seq_size
    nodes = nodes.reshape(B, seq_size, N, D)
    edges = edges.reshape(B, seq_size, E, D)
    adj = adj.reshape(B, seq_size, N, E)
    losses = []
    for b in range(B):
        for s in range(int(true_lengths[b])):
            rows, cols = np.where(adj[b, s] == 1)
            for r, c in zip(rows, cols):
                f_i = nodes[b, s, r] @ w1 + b1[0]
                f_ij = edges[b, s, c] @ w2 + b2[0]
                f_j = nodes[b, s, (c - r * N) % N] @ w3 + b3[0]
                losses.append(np.mean((f_j - (f_ij + f_i)) ** 2))
    losses = np.array(losses)
    num = len(np.argwhere(losses > 0.0))
    return losses.sum() / num


if __name__ == "__main__":
    key = jax.random.PRNGKey(0)
    B, S, N, D = 2, 2, 4, 32          # batch, seq_size, node_num, state_dim
    E = N * N                         # edge_num (edge j connects nodes (j//N, j%N))
    k = jax.random.split(key, 9)

    nodes_feats = jax.random.normal(k[0], (B * S, N, D), jnp.float32)
    edges_feats = jax.random.normal(k[1], (B * S, E, D), jnp.float32)

    # adjacency: adj[bs, i, j] == 1 only for j in [i*N, (i+1)*N), exactly the
    # structure the reference's node_feat[j - i*N] indexing assumes.
    bern = (jax.random.uniform(k[2], (B * S, N, N)) < 0.5).astype(jnp.float32)
    eye = jnp.eye(N, dtype=jnp.float32)
    adj4 = bern[:, :, None, :] * eye[None, :, :, None]   # (BS, i, src, dst)
    adj_mat = adj4.reshape(B * S, N, E)

    true_lengths = jnp.array([2, 1], dtype=jnp.int32)

    w1 = 0.1 * jax.random.normal(k[3], (D, PROJ), jnp.float32)
    b1 = 0.1 * jax.random.normal(k[4], (1, PROJ), jnp.float32)
    w2 = 0.1 * jax.random.normal(k[5], (D, PROJ), jnp.float32)
    b2 = 0.1 * jax.random.normal(k[6], (1, PROJ), jnp.float32)
    w3 = 0.1 * jax.random.normal(k[7], (D, PROJ), jnp.float32)
    b3 = 0.1 * jax.random.normal(k[8], (1, PROJ), jnp.float32)
    params = (w1, b1, w2, b2, w3, b3)

    loss = semantic_loss(nodes_feats, edges_feats, adj_mat, true_lengths, params, S)
    loss = jax.block_until_ready(loss)

    ref = reference_loss(nodes_feats, edges_feats, adj_mat, true_lengths, params, S)
    np.testing.assert_allclose(float(loss), float(ref), rtol=3e-2, atol=1e-4)
    print("KERNEL_OK")
</pallas_src>

<mosaic_0001>
module attributes {stable_mosaic.version = 11 : i64} {
  func.func @semantic_kernel(%arg0: i32, %arg1: i32, %arg2: memref<2xi32, #tpu.memory_space<smem>>, %arg3: memref<1x8x32xbf16, #tpu.memory_space<vmem>>, %arg4: memref<1x32x32xbf16, #tpu.memory_space<vmem>>, %arg5: memref<1x2x4x4x4xi32, #tpu.memory_space<vmem>>, %arg6: memref<32x768xbf16, #tpu.memory_space<vmem>>, %arg7: memref<32x384xbf16, #tpu.memory_space<vmem>>, %arg8: memref<1x384xf32, #tpu.memory_space<vmem>>, %arg9: memref<1x1x1xf32, #tpu.memory_space<vmem>>, %arg10: memref<1x1x1xf32, #tpu.memory_space<vmem>>) attributes {dimension_semantics = [#tpu.dimension_semantics<parallel>, #tpu.dimension_semantics<arbitrary>], iteration_bounds = array<i64: 2, 1>, scalar_prefetch = 1 : i64, scratch_operands = 0 : i64, tpu.core_type = #tpu.core_type<tc>, window_params = [{transform_indices = @transform_0, window_bounds = array<i64: 1, 8, 32>}, {transform_indices = @transform_1, window_bounds = array<i64: 1, 32, 32>}, {transform_indices = @transform_2, window_bounds = array<i64: 1, 2, 4, 4, 4>}, {pipeline_mode = #tpu.pipeline_mode<synchronous>, transform_indices = @transform_3, window_bounds = array<i64: 32, 768>}, {pipeline_mode = #tpu.pipeline_mode<synchronous>, transform_indices = @transform_4, window_bounds = array<i64: 32, 384>}, {pipeline_mode = #tpu.pipeline_mode<synchronous>, transform_indices = @transform_5, window_bounds = array<i64: 1, 384>}, {transform_indices = @transform_6, window_bounds = array<i64: 1, 1, 1>}, {transform_indices = @transform_7, window_bounds = array<i64: 1, 1, 1>}]} {
    %c0_i32 = arith.constant 0 : i32
    %0 = arith.cmpi eq, %arg1, %c0_i32 : i32
    %1 = arith.extui %0 : i1 to i32
    %c0_i32_0 = arith.constant 0 : i32
    %2 = arith.cmpi ne, %1, %c0_i32_0 : i32
    scf.if %2 {
      %cst = arith.constant 0.000000e+00 : f32
      %9 = vector.broadcast %cst : f32 to vector<1x1x1xf32>
      %c0 = arith.constant 0 : index
      %c0_2 = arith.constant 0 : index
      %c0_3 = arith.constant 0 : index
      %10 = vector.load %arg9[%c0, %c0_2, %c0_3] : memref<1x1x1xf32, #tpu.memory_space<vmem>>, vector<1x1x1xf32>
      tpu.vector_store %arg9[%c0, %c0_2, %c0_3], %9 {strides = array<i32>} : memref<1x1x1xf32, #tpu.memory_space<vmem>>, vector<1x1x1xf32>,
      %cst_4 = arith.constant 0.000000e+00 : f32
      %11 = vector.broadcast %cst_4 : f32 to vector<1x1x1xf32>
      %c0_5 = arith.constant 0 : index
      %c0_6 = arith.constant 0 : index
      %c0_7 = arith.constant 0 : index
      %12 = vector.load %arg10[%c0_5, %c0_6, %c0_7] : memref<1x1x1xf32, #tpu.memory_space<vmem>>, vector<1x1x1xf32>
      tpu.vector_store %arg10[%c0_5, %c0_6, %c0_7], %11 {strides = array<i32>} : memref<1x1x1xf32, #tpu.memory_space<vmem>>, vector<1x1x1xf32>,
    } else {
    }
    %3 = arith.index_cast %arg0 : i32 to index
    %4 = memref.load %arg2[%3] : memref<2xi32, #tpu.memory_space<smem>>
    %c2_i32 = arith.constant 2 : i32
    %5 = arith.muli %arg1, %c2_i32 : i32
    %6 = arith.cmpi slt, %5, %4 : i32
    %7 = arith.extui %6 : i1 to i32
    %c0_i32_1 = arith.constant 0 : i32
    %8 = arith.cmpi ne, %7, %c0_i32_1 : i32
    scf.if %8 {
      %c0 = arith.constant 0 : index
      %c0_2 = arith.constant 0 : index
      %c0_3 = arith.constant 0 : index
      %9 = vector.load %arg3[%c0, %c0_2, %c0_3] : memref<1x8x32xbf16, #tpu.memory_space<vmem>>, vector<1x8x32xbf16>
      %10 = vector.shape_cast %9 : vector<1x8x32xbf16> to vector<8x32xbf16>
      %c0_4 = arith.constant 0 : index
      %c0_5 = arith.constant 0 : index
      %c0_6 = arith.constant 0 : index
      %11 = vector.load %arg4[%c0_4, %c0_5, %c0_6] : memref<1x32x32xbf16, #tpu.memory_space<vmem>>, vector<1x32x32xbf16>
      %12 = vector.shape_cast %11 : vector<1x32x32xbf16> to vector<32x32xbf16>
      %c0_7 = arith.constant 0 : index
      %c0_8 = arith.constant 0 : index
      %13 = vector.load %arg6[%c0_7, %c0_8] : memref<32x768xbf16, #tpu.memory_space<vmem>>, vector<32x768xbf16>
      %cst = arith.constant dense<0.000000e+00> : vector<8x768xf32>
      %14 = tpu.matmul %10, %13, %cst {dimension_numbers = #tpu.dot_dimension_numbers<[1], [0], [0], [1], [0, 0, 1, 1], [], []>} : vector<8x32xbf16>, vector<32x768xbf16>, vector<8x768xf32> -> vector<8x768xf32>
      %c0_9 = arith.constant 0 : index
      %c0_10 = arith.constant 0 : index
      %15 = vector.load %arg7[%c0_9, %c0_10] : memref<32x384xbf16, #tpu.memory_space<vmem>>, vector<32x384xbf16>
      %cst_11 = arith.constant dense<0.000000e+00> : vector<32x384xf32>
      %16 = tpu.matmul %12, %15, %cst_11 {dimension_numbers = #tpu.dot_dimension_numbers<[1], [0], [0], [1], [0, 0, 1, 1], [], []>} : vector<32x32xbf16>, vector<32x384xbf16>, vector<32x384xf32> -> vector<32x384xf32>
      %17 = vector.extract_strided_slice %14 {offsets = [0, 0], sizes = [8, 384], strides = [1, 1]} : vector<8x768xf32> to vector<8x384xf32>
      %18 = vector.shape_cast %17 : vector<8x384xf32> to vector<2x4x1x1x384xf32>
      %19 = vector.extract_strided_slice %14 {offsets = [0, 384], sizes = [8, 384], strides = [1, 1]} : vector<8x768xf32> to vector<8x384xf32>
      %20 = vector.shape_cast %19 : vector<8x384xf32> to vector<2x1x1x4x384xf32>
      %21 = vector.shape_cast %16 : vector<32x384xf32> to vector<2x1x4x4x384xf32>
      %22 = vector.broadcast %20 : vector<2x1x1x4x384xf32> to vector<2x1x4x4x384xf32>
      %23 = arith.subf %22, %21 : vector<2x1x4x4x384xf32>
      %c0_12 = arith.constant 0 : index
      %c0_13 = arith.constant 0 : index
      %24 = vector.load %arg8[%c0_12, %c0_13] : memref<1x384xf32, #tpu.memory_space<vmem>>, vector<1x384xf32>
      %25 = vector.shape_cast %24 : vector<1x384xf32> to vector<1x1x1x1x384xf32>
      %26 = vector.broadcast %25 : vector<1x1x1x1x384xf32> to vector<2x1x4x4x384xf32>
      %27 = arith.addf %23, %26 : vector<2x1x4x4x384xf32>
      %28 = vector.broadcast %27 : vector<2x1x4x4x384xf32> to vector<2x4x4x4x384xf32>
      %29 = vector.broadcast %18 : vector<2x4x1x1x384xf32> to vector<2x4x4x4x384xf32>
      %30 = arith.subf %28, %29 : vector<2x4x4x4x384xf32>
      %31 = arith.mulf %30, %30 : vector<2x4x4x4x384xf32>
      %cst_14 = arith.constant dense<0.000000e+00> : vector<2x4x4x4xf32>
      %32 = vector.multi_reduction <add>, %31, %cst_14 [4] : vector<2x4x4x4x384xf32> to vector<2x4x4x4xf32>
      %cst_15 = arith.constant 0.00333333341 : f32
      %33 = vector.broadcast %cst_15 : f32 to vector<2x4x4x4xf32>
      %34 = arith.mulf %32, %33 : vector<2x4x4x4xf32>
      %35 = tpu.iota {dimensions = array<i32: 0>} : vector<2x4x4x4xi32>
      %36 = vector.broadcast %5 : i32 to vector<2x4x4x4xi32>
      %37 = arith.addi %36, %35 : vector<2x4x4x4xi32>
      %c0_16 = arith.constant 0 : index
      %c0_17 = arith.constant 0 : index
      %c0_18 = arith.constant 0 : index
      %c0_19 = arith.constant 0 : index
      %c0_20 = arith.constant 0 : index
      %38 = vector.load %arg5[%c0_16, %c0_17, %c0_18, %c0_19, %c0_20] : memref<1x2x4x4x4xi32, #tpu.memory_space<vmem>>, vector<1x2x4x4x4xi32>
      %39 = vector.shape_cast %38 : vector<1x2x4x4x4xi32> to vector<2x4x4x4xi32>
      %c1_i32 = arith.constant 1 : i32
      %40 = vector.broadcast %c1_i32 : i32 to vector<2x4x4x4xi32>
      %41 = arith.cmpi eq, %39, %40 : vector<2x4x4x4xi32>
      %42 = vector.broadcast %4 : i32 to vector<2x4x4x4xi32>
      %43 = arith.cmpi slt, %37, %42 : vector<2x4x4x4xi32>
      %44 = arith.andi %41, %43 : vector<2x4x4x4xi1>
      %c0_21 = arith.constant 0 : index
      %c0_22 = arith.constant 0 : index
      %c0_23 = arith.constant 0 : index
      %45 = vector.load %arg9[%c0_21, %c0_22, %c0_23] : memref<1x1x1xf32, #tpu.memory_space<vmem>>, vector<1x1x1xf32>
      %cst_24 = arith.constant 0.000000e+00 : f32
      %46 = vector.broadcast %cst_24 : f32 to vector<2x4x4x4xf32>
      %47 = arith.select %44, %34, %46 : vector<2x4x4x4xi1>, vector<2x4x4x4xf32>
      %48 = vector.shape_cast %47 : vector<2x4x4x4xf32> to vector<1x2x4x4x4xf32>
      %cst_25 = arith.constant dense<0.000000e+00> : vector<1xf32>
      %49 = vector.multi_reduction <add>, %48, %cst_25 [1, 2, 3, 4] : vector<1x2x4x4x4xf32> to vector<1xf32>
      %50 = vector.shape_cast %49 : vector<1xf32> to vector<1x1x1x1x1xf32>
      %51 = vector.extract %50[0, 0, 0, 0, 0] : f32 from vector<1x1x1x1x1xf32>
      %52 = vector.broadcast %51 : f32 to vector<1x1x1xf32>
      %53 = arith.addf %45, %52 : vector<1x1x1xf32>
      %c0_26 = arith.constant 0 : index
      %c0_27 = arith.constant 0 : index
      %c0_28 = arith.constant 0 : index
      %54 = vector.load %arg9[%c0_26, %c0_27, %c0_28] : memref<1x1x1xf32, #tpu.memory_space<vmem>>, vector<1x1x1xf32>
      tpu.vector_store %arg9[%c0_26, %c0_27, %c0_28], %53 {strides = array<i32>} : memref<1x1x1xf32, #tpu.memory_space<vmem>>, vector<1x1x1xf32>,
      %c0_29 = arith.constant 0 : index
      %c0_30 = arith.constant 0 : index
      %c0_31 = arith.constant 0 : index
      %55 = vector.load %arg10[%c0_29, %c0_30, %c0_31] : memref<1x1x1xf32, #tpu.memory_space<vmem>>, vector<1x1x1xf32>
      %cst_32 = arith.constant 0.000000e+00 : f32
      %56 = vector.broadcast %cst_32 : f32 to vector<2x4x4x4xf32>
      %57 = arith.cmpf ogt, %34, %56 : vector<2x4x4x4xf32>
      %58 = arith.andi %44, %57 : vector<2x4x4x4xi1>
      %cst_33 = arith.constant 1.000000e+00 : f32
      %cst_34 = arith.constant 0.000000e+00 : f32
      %59 = vector.broadcast %cst_33 : f32 to vector<2x4x4x4xf32>
      %60 = vector.broadcast %cst_34 : f32 to vector<2x4x4x4xf32>
      %61 = arith.select %58, %59, %60 : vector<2x4x4x4xi1>, vector<2x4x4x4xf32>
      %62 = vector.shape_cast %61 : vector<2x4x4x4xf32> to vector<1x2x4x4x4xf32>
      %cst_35 = arith.constant dense<0.000000e+00> : vector<1xf32>
      %63 = vector.multi_reduction <add>, %62, %cst_35 [1, 2, 3, 4] : vector<1x2x4x4x4xf32> to vector<1xf32>
      %64 = vector.shape_cast %63 : vector<1xf32> to vector<1x1x1x1x1xf32>
      %65 = vector.extract %64[0, 0, 0, 0, 0] : f32 from vector<1x1x1x1x1xf32>
      %66 = vector.broadcast %65 : f32 to vector<1x1x1xf32>
      %67 = arith.addf %55, %66 : vector<1x1x1xf32>
      %c0_36 = arith.constant 0 : index
      %c0_37 = arith.constant 0 : index
      %c0_38 = arith.constant 0 : index
      %68 = vector.load %arg10[%c0_36, %c0_37, %c0_38] : memref<1x1x1xf32, #tpu.memory_space<vmem>>, vector<1x1x1xf32>
      tpu.vector_store %arg10[%c0_36, %c0_37, %c0_38], %67 {strides = array<i32>} : memref<1x1x1xf32, #tpu.memory_space<vmem>>, vector<1x1x1xf32>,
    } else {
    }
    return
  }
  func.func @transform_0(%arg0: i32, %arg1: i32, %arg2: memref<2xi32, #tpu.memory_space<smem>>) -> (i32, i32, i32) {
    %c0_i32 = arith.constant 0 : i32
    %c0_i32_0 = arith.constant 0 : i32
    return %arg0, %arg1, %c0_i32 : i32, i32, i32
  }
  func.func @transform_1(%arg0: i32, %arg1: i32, %arg2: memref<2xi32, #tpu.memory_space<smem>>) -> (i32, i32, i32) {
    %c0_i32 = arith.constant 0 : i32
    %c0_i32_0 = arith.constant 0 : i32
    return %arg0, %arg1, %c0_i32 : i32, i32, i32
  }
  func.func @transform_2(%arg0: i32, %arg1: i32, %arg2: memref<2xi32, #tpu.memory_space<smem>>) -> (i32, i32, i32, i32, i32) {
    %c0_i32 = arith.constant 0 : i32
    %c0_i32_0 = arith.constant 0 : i32
    %c0_i32_1 = arith.constant 0 : i32
    %c0_i32_2 = arith.constant 0 : i32
    return %arg0, %arg1, %c0_i32, %c0_i32_0, %c0_i32_1 : i32, i32, i32, i32, i32
  }
  func.func @transform_3(%arg0: i32, %arg1: i32, %arg2: memref<2xi32, #tpu.memory_space<smem>>) -> (i32, i32) {
    %c0_i32 = arith.constant 0 : i32
    %c0_i32_0 = arith.constant 0 : i32
    %c0_i32_1 = arith.constant 0 : i32
    return %c0_i32, %c0_i32_0 : i32, i32
  }
  func.func @transform_4(%arg0: i32, %arg1: i32, %arg2: memref<2xi32, #tpu.memory_space<smem>>) -> (i32, i32) {
    %c0_i32 = arith.constant 0 : i32
    %c0_i32_0 = arith.constant 0 : i32
    %c0_i32_1 = arith.constant 0 : i32
    return %c0_i32, %c0_i32_0 : i32, i32
  }
  func.func @transform_5(%arg0: i32, %arg1: i32, %arg2: memref<2xi32, #tpu.memory_space<smem>>) -> (i32, i32) {
    %c0_i32 = arith.constant 0 : i32
    %c0_i32_0 = arith.constant 0 : i32
    %c0_i32_1 = arith.constant 0 : i32
    return %c0_i32, %c0_i32_0 : i32, i32
  }
  func.func @transform_6(%arg0: i32, %arg1: i32, %arg2: memref<2xi32, #tpu.memory_space<smem>>) -> (i32, i32, i32) {
    %c0_i32 = arith.constant 0 : i32
    %c0_i32_0 = arith.constant 0 : i32
    %c0_i32_1 = arith.constant 0 : i32
    return %arg0, %c0_i32, %c0_i32_0 : i32, i32, i32
  }
  func.func @transform_7(%arg0: i32, %arg1: i32, %arg2: memref<2xi32, #tpu.memory_space<smem>>) -> (i32, i32, i32) {
    %c0_i32 = arith.constant 0 : i32
    %c0_i32_0 = arith.constant 0 : i32
    %c0_i32_1 = arith.constant 0 : i32
    return %arg0, %c0_i32, %c0_i32_0 : i32, i32, i32
  }
}

</mosaic_0001>

<llo_original>
// kernel: tpu_custom_call.1
$region0: #{tpu_custom_call.1}
  #allocation0 [shape = 'u32[]', space=smem, size = 0x4, offset = 0x4, fixed_abs, tag = 'smem constant byte address 0x4 - core index']
  #allocation1 [shape = 'u32[144,128]{1,0:T(1,128)}', space=vmem, size = 0x12000, scoped, tag = 'internal scratch']
  #allocation2 [shape = 's32[1]{0}', space=sflag, size = 0x4, scoped, tag = 'scoped memory for tpu_custom_call.1']
  #allocation3 [shape = 'u8[512]{0}', space=smem, size = 0x200, scoped, tag = 'prefetched SMEM operand 0']
  %s0 = inlined_call_operand.hbm [shape: s32[2], index: 0, kind: input, shape index: {}]
  %s1 = inlined_call_operand.hbm [shape: bf16[2,8,32], index: 1, kind: input, shape index: {}]
  %s2 = inlined_call_operand.hbm [shape: bf16[2,32,32], index: 2, kind: input, shape index: {}]
  %s3 = inlined_call_operand.hbm [shape: s32[2,2,4,4,4], index: 3, kind: input, shape index: {}]
  %s4 = inlined_call_operand.hbm [shape: bf16[32,768], index: 4, kind: input, shape index: {}]
  %s5 = inlined_call_operand.hbm [shape: bf16[32,384], index: 5, kind: input, shape index: {}]
  %s6 = inlined_call_operand.vmem [shape: f32[1,384], index: 6, kind: input, shape index: {}]
  %s7 = inlined_call_operand.vmem [shape: f32[2,1,1], index: 7, kind: output, shape index: {0}]
  %s8 = inlined_call_operand.vmem [shape: f32[2,1,1], index: 8, kind: output, shape index: {1}]
  %9 = xla_tuple %s7, %s8
  %s10 = sld [smem:[#allocation0]]
  $region93: #{tpu_custom_call.1} parent=0
    _
  %s12 = ssub.s32 1, %s10
  %s13 = scalar_select 0, %s12, %s10
  %15 = dma.hbm_to_smem %s0, 16, [#allocation3], [#allocation2]
  %16 = dma.done [#allocation2], 16
  %17 = sfence
  $region1: #{tpu_custom_call.1} parent=0
    #allocation4 [shape = 'u8[4096]{0}', space=vmem, size = 0x1000, scoped, tag = 'input window, operand 1']
    #allocation5 [shape = 's32[2]{0}', space=sflag, size = 0x8, scoped, tag = 'scoped memory for tpu_custom_call.1']
    #allocation6 [shape = 'u8[16384]{0}', space=vmem, size = 0x4000, scoped, tag = 'input window, operand 2']
    #allocation7 [shape = 's32[2]{0}', space=sflag, size = 0x8, scoped, tag = 'scoped memory for tpu_custom_call.1']
    #allocation8 [shape = 'u8[32768]{0}', space=vmem, size = 0x8000, scoped, tag = 'input window, operand 3']
    #allocation9 [shape = 'u8[49152]{0}', space=vmem, size = 0xc000, scoped, tag = 'input window, operand 4, single buffered']
    #allocation10 [shape = 's32[1]{0}', space=sflag, size = 0x4, scoped, tag = 'scoped memory for tpu_custom_call.1']
    #allocation11 [shape = 'u8[24576]{0}', space=vmem, size = 0x6000, scoped, tag = 'input window, operand 5, single buffered']
    %18 = vsyncpa [#allocation5], 0
    %s19 = scalar_lea.sflag [#allocation5], 1
    %20 = vsyncpa %s19, 0
    %21 = vsyncpa [#allocation7], 0
    %s22 = scalar_lea.sflag [#allocation7], 1
    %23 = vsyncpa %s22, 0
    %24 = vsyncpa [#allocation10], 0
    loop: start=0, step=1, limit=4
    $region2: #{tpu_custom_call.1} parent=1 // loop_pre_header
      _
    $region3: #{tpu_custom_call.1} parent=1 // loop_header
      %s26 = sphi 0, %s30
      %p27 = scmp.ge.s32.totalorder %s26, 4
      %s33 = sphi 0, %s45
      %s34 = sphi 0, %s41
      %s35 = sphi 0, %s33
      %s36 = sphi 0, %s34
      %s37 = sphi 0, %s35
      %s38 = sphi 0, %s36
      %s50 = sphi 0, %s52
      %s53 = sphi 0, %s50
      %s54 = sphi 0, %s53
      %s70 = sphi 0, %s54
      %s78 = sphi 0, %s80
      %s81 = sphi 0, %s78
      %s82 = sphi 0, %s81
      %s98 = sphi 0, %s82
      %s106 = sphi 0, %s108
      %s109 = sphi 0, %s106
      %s110 = sphi 0, %s109
      %s126 = sphi 0, %s110
      %s130 = sphi 0, %s130
      %s132 = sphi 0, %s130
      %s133 = sphi 0, %s132
      %s147 = sphi 0, %s133
      %s151 = sphi 0, %s151
      %s153 = sphi 0, %s151
      %s154 = sphi 0, %s153
      %s168 = sphi 0, %s154
      %s172 = sphi 0, %s172
      %s174 = sphi 0, %s172
      %s175 = sphi 0, %s174
      %s189 = sphi 0, %s175
      %s195 = sphi 0, %s197
      %s198 = sphi 0, %s195
      %s199 = sphi 0, %s198
      %s215 = sphi 0, %s199
      %s221 = sphi 0, %s223
      %s224 = sphi 0, %s221
      %s225 = sphi 0, %s224
      %s241 = sphi 0, %s225
    $region4: #{tpu_custom_call.1} parent=1 // loop_header_branch
      %29 = sbr.rel (%p27) target = $region8
    $region5: #{tpu_custom_call.1} parent=1 // loop_body
      %s31 = ssub.s32 %s26, 1
      %s32 = ssub.s32 %s26, 2
      %s39 = sadd.s32 1, %s34
      %p40 = scmp.ge.s32.totalorder %s39, 1
      %s41 = scalar_select %p40, 0, %s39
      %s42 = sadd.s32 1, %s33
      %s43 = scalar_select %p40, %s42, %s33
      %p44 = scmp.ge.s32.totalorder %s43, 2
      %s45 = scalar_select %p44, 0, %s43
      %s46 = ssub.s32 %s33, %s45
      %s47 = ssub.s32 %s34, %s41
      %s48 = sor.u32 %s46, %s47
      %p49 = scmp.eq.s32.totalorder %s48, 0
      %s51 = sadd.s32 %s50, 1
      %s52 = scalar_select %p49, %s50, %s51
      %p55 = pneg %p49
      %p56 = scmp.eq.s32.totalorder %s26, 1
      %p57 = por %p55, %p56
      %p58 = scmp.ne.s32.totalorder %s50, %s53
      %p59 = scmp.eq.s32.totalorder %s26, 0
      %p60 = por %p58, %p59
      %p61 = scmp.ne.s32.totalorder %s50, %s53
      %p62 = scmp.eq.s32.totalorder %s31, 1
      %p63 = por %p61, %p62
      %p64 = scmp.ne.s32.totalorder %s53, %s54
      %p65 = scmp.eq.s32.totalorder %s31, 0
      %p66 = por %p64, %p65
      %p67 = scmp.ne.s32.totalorder %s53, %s54
      %p68 = scmp.eq.s32.totalorder %s32, 1
      %p69 = por %p67, %p68
      %p71 = scmp.ne.s32.totalorder %s54, %s70
      %p72 = scmp.eq.s32.totalorder %s32, 0
      %p73 = por %p71, %p72
      %s74 = ssub.s32 %s33, %s45
      %s75 = ssub.s32 %s34, %s41
      %s76 = sor.u32 %s74, %s75
      %p77 = scmp.eq.s32.totalorder %s76, 0
      %s79 = sadd.s32 %s78, 1
      %s80 = scalar_select %p77, %s78, %s79
      %p83 = pneg %p77
      %p84 = scmp.eq.s32.totalorder %s26, 1
      %p85 = por %p83, %p84
      %p86 = scmp.ne.s32.totalorder %s78, %s81
      %p87 = scmp.eq.s32.totalorder %s26, 0
      %p88 = por %p86, %p87
      %p89 = scmp.ne.s32.totalorder %s78, %s81
      %p90 = scmp.eq.s32.totalorder %s31, 1
      %p91 = por %p89, %p90
      %p92 = scmp.ne.s32.totalorder %s81, %s82
      %p93 = scmp.eq.s32.totalorder %s31, 0
      %p94 = por %p92, %p93
      %p95 = scmp.ne.s32.totalorder %s81, %s82
      %p96 = scmp.eq.s32.totalorder %s32, 1
      %p97 = por %p95, %p96
      %p99 = scmp.ne.s32.totalorder %s82, %s98
      %p100 = scmp.eq.s32.totalorder %s32, 0
      %p101 = por %p99, %p100
      %s102 = ssub.s32 %s33, %s45
      %s103 = ssub.s32 %s34, %s41
      %s104 = sor.u32 %s102, %s103
      %p105 = scmp.eq.s32.totalorder %s104, 0
      %s107 = sadd.s32 %s106, 1
      %s108 = scalar_select %p105, %s106, %s107
      %p111 = pneg %p105
      %p112 = scmp.eq.s32.totalorder %s26, 1
      %p113 = por %p111, %p112
      %p114 = scmp.ne.s32.totalorder %s106, %s109
      %p115 = scmp.eq.s32.totalorder %s26, 0
      %p116 = por %p114, %p115
      %p117 = scmp.ne.s32.totalorder %s106, %s109
      %p118 = scmp.eq.s32.totalorder %s31, 1
      %p119 = por %p117, %p118
      %p120 = scmp.ne.s32.totalorder %s109, %s110
      %p121 = scmp.eq.s32.totalorder %s31, 0
      %p122 = por %p120, %p121
      %p123 = scmp.ne.s32.totalorder %s109, %s110
      %p124 = scmp.eq.s32.totalorder %s32, 1
      %p125 = por %p123, %p124
      %p127 = scmp.ne.s32.totalorder %s110, %s126
      %p128 = scmp.eq.s32.totalorder %s32, 0
      %p129 = por %p127, %p128
      %s131 = sadd.s32 %s130, 1
      %p134 = scmp.eq.s32.totalorder %s26, 1
      %p135 = scmp.ne.s32.totalorder %s130, %s132
      %p136 = scmp.eq.s32.totalorder %s26, 0
      %p137 = por %p135, %p136
      %p138 = scmp.ne.s32.totalorder %s130, %s132
      %p139 = scmp.eq.s32.totalorder %s31, 1
      %p140 = por %p138, %p139
      %p141 = scmp.ne.s32.totalorder %s132, %s133
      %p142 = scmp.eq.s32.totalorder %s31, 0
      %p143 = por %p141, %p142
      %p144 = scmp.ne.s32.totalorder %s132, %s133
      %p145 = scmp.eq.s32.totalorder %s32, 1
      %p146 = por %p144, %p145
      %p148 = scmp.ne.s32.totalorder %s133, %s147
      %p149 = scmp.eq.s32.totalorder %s32, 0
      %p150 = por %p148, %p149
      %s152 = sadd.s32 %s151, 1
      %p155 = scmp.eq.s32.totalorder %s26, 1
      %p156 = scmp.ne.s32.totalorder %s151, %s153
      %p157 = scmp.eq.s32.totalorder %s26, 0
      %p158 = por %p156, %p157
      %p159 = scmp.ne.s32.totalorder %s151, %s153
      %p160 = scmp.eq.s32.totalorder %s31, 1
      %p161 = por %p159, %p160
      %p162 = scmp.ne.s32.totalorder %s153, %s154
      %p163 = scmp.eq.s32.totalorder %s31, 0
      %p164 = por %p162, %p163
      %p165 = scmp.ne.s32.totalorder %s153, %s154
      %p166 = scmp.eq.s32.totalorder %s32, 1
      %p167 = por %p165, %p166
      %p169 = scmp.ne.s32.totalorder %s154, %s168
      %p170 = scmp.eq.s32.totalorder %s32, 0
      %p171 = por %p169, %p170
      %s173 = sadd.s32 %s172, 1
      %p176 = scmp.eq.s32.totalorder %s26, 1
      %p177 = scmp.ne.s32.totalorder %s172, %s174
      %p178 = scmp.eq.s32.totalorder %s26, 0
      %p179 = por %p177, %p178
      %p180 = scmp.ne.s32.totalorder %s172, %s174
      %p181 = scmp.eq.s32.totalorder %s31, 1
      %p182 = por %p180, %p181
      %p183 = scmp.ne.s32.totalorder %s174, %s175
      %p184 = scmp.eq.s32.totalorder %s31, 0
      %p185 = por %p183, %p184
      %p186 = scmp.ne.s32.totalorder %s174, %s175
      %p187 = scmp.eq.s32.totalorder %s32, 1
      %p188 = por %p186, %p187
      %p190 = scmp.ne.s32.totalorder %s175, %s189
      %p191 = scmp.eq.s32.totalorder %s32, 0
      %p192 = por %p190, %p191
      %s193 = ssub.s32 %s33, %s45
      %p194 = scmp.eq.s32.totalorder %s193, 0
      %s196 = sadd.s32 %s195, 1
      %s197 = scalar_select %p194, %s195, %s196
      %p200 = pneg %p194
      %p201 = scmp.eq.s32.totalorder %s26, 1
      %p202 = por %p200, %p201
      %p203 = scmp.ne.s32.totalorder %s195, %s198
      %p204 = scmp.eq.s32.totalorder %s26, 0
      %p205 = por %p203, %p204
      %p206 = scmp.ne.s32.totalorder %s195, %s198
      %p207 = scmp.eq.s32.totalorder %s31, 1
      %p208 = por %p206, %p207
      %p209 = scmp.ne.s32.totalorder %s198, %s199
      %p210 = scmp.eq.s32.totalorder %s31, 0
      %p211 = por %p209, %p210
      %p212 = scmp.ne.s32.totalorder %s198, %s199
      %p213 = scmp.eq.s32.totalorder %s32, 1
      %p214 = por %p212, %p213
      %p216 = scmp.ne.s32.totalorder %s199, %s215
      %p217 = scmp.eq.s32.totalorder %s32, 0
      %p218 = por %p216, %p217
      %s219 = ssub.s32 %s33, %s45
      %p220 = scmp.eq.s32.totalorder %s219, 0
      %s222 = sadd.s32 %s221, 1
      %s223 = scalar_select %p220, %s221, %s222
      %p226 = pneg %p220
      %p227 = scmp.eq.s32.totalorder %s26, 1
      %p228 = por %p226, %p227
      %p229 = scmp.ne.s32.totalorder %s221, %s224
      %p230 = scmp.eq.s32.totalorder %s26, 0
      %p231 = por %p229, %p230
      %p232 = scmp.ne.s32.totalorder %s221, %s224
      %p233 = scmp.eq.s32.totalorder %s31, 1
      %p234 = por %p232, %p233
      %p235 = scmp.ne.s32.totalorder %s224, %s225
      %p236 = scmp.eq.s32.totalorder %s31, 0
      %p237 = por %p235, %p236
      %p238 = scmp.ne.s32.totalorder %s224, %s225
      %p239 = scmp.eq.s32.totalorder %s32, 1
      %p240 = por %p238, %p239
      %p242 = scmp.ne.s32.totalorder %s225, %s241
      %p243 = scmp.eq.s32.totalorder %s32, 0
      %p244 = por %p242, %p243
      %p245 = scmp.le.s32.totalorder 1, %s26
      %p246 = scmp.lt.s32.totalorder %s26, 3
      %p247 = pnand %p245, %p246
      %p248 = pneg %p247
      // Predicated region
      $region9: #{tpu_custom_call.1} parent=5 // pred_check
        _
      $region10: #{tpu_custom_call.1} parent=5 // pred_check_branch
        %250 = sbr.rel (%p247) target = $region12
      $region11: #{tpu_custom_call.1} parent=5 // pred_region
        %s251 = ssub.s32 %s26, 1
        // Predicated region
        $region13: #{tpu_custom_call.1} parent=11 // pred_check
          %p252 = pneg %p143
        $region14: #{tpu_custom_call.1} parent=11 // pred_check_branch
          %254 = sbr.rel (%p252) target = $region16
        $region15: #{tpu_custom_call.1} parent=11 // pred_region
          %s256 = ssub.s32 1536, 1536
          %257 = vsyncadd [#allocation10], %s256
          %s258 = sshll.u32 [#allocation9], 4
          %s259 = int_to_ptr.vmem [resolvable:$true] %s258
          %264 = dma.hbm_to_vmem [thread:$0]  %s4, 1536, %s259, [#allocation10], 384, 384, 24
        $region16: #{tpu_custom_call.1} parent=11 // pred_fallthru
          _
        // Predicated region
        $region17: #{tpu_custom_call.1} parent=11 // pred_check
          %p265 = pneg %p164
        $region18: #{tpu_custom_call.1} parent=11 // pred_check_branch
          %267 = sbr.rel (%p265) target = $region20
        $region19: #{tpu_custom_call.1} parent=11 // pred_region
          %s269 = ssub.s32 768, 768
          %270 = vsyncadd [#allocation10], %s269
          %s271 = sshll.u32 [#allocation11], 4
          %s272 = int_to_ptr.vmem [resolvable:$true] %s271
          %277 = dma.hbm_to_vmem [thread:$0]  %s5, 768, %s272, [#allocation10], 192, 192, 12
        $region20: #{tpu_custom_call.1} parent=11 // pred_fallthru
          _
        // Predicated region
        $region21: #{tpu_custom_call.1} parent=11 // pred_check
          %p278 = pneg %p185
        $region22: #{tpu_custom_call.1} parent=11 // pred_check_branch
          %280 = sbr.rel (%p278) target = $region24
        $region23: #{tpu_custom_call.1} parent=11 // pred_region
          _
        $region24: #{tpu_custom_call.1} parent=11 // pred_fallthru
          _
      $region12: #{tpu_custom_call.1} parent=5 // pred_fallthru
        _
      %p281 = scmp.lt.s32.totalorder %s26, 2
      // Predicated region
      $region25: #{tpu_custom_call.1} parent=5 // pred_check
        %p282 = pneg %p281
      $region26: #{tpu_custom_call.1} parent=5 // pred_check_branch
        %284 = sbr.rel (%p282) target = $region28
      $region27: #{tpu_custom_call.1} parent=5 // pred_region
        // Predicated region
        $region29: #{tpu_custom_call.1} parent=27 // pred_check
          %p285 = pneg %p60
        $region30: #{tpu_custom_call.1} parent=27 // pred_check_branch
          %287 = sbr.rel (%p285) target = $region32
        $region31: #{tpu_custom_call.1} parent=27 // pred_region
          %s288 = sand.u32 %s50, 1
          %s289 = scalar_lea.sflag [#allocation5], %s288
          %s290 = sand.u32 %s50, 1
          %s291 = smul.addr %s290, 4
          %s292 = scalar_lea.vmem [#allocation4], %s291
          %s294 = ssub.s32 64, 64
          %295 = vsyncadd %s289, %s294
          %s296 = sadd.s32 %s34, %s33
          %s297 = smul.addr %s296, 64
          %s298 = scalar_lea.hbm %s1, %s297
          %s300 = sshll.u32 %s292, 4
          %s301 = int_to_ptr.vmem [resolvable:$true] %s300
          %303 = dma.hbm_to_vmem [thread:$0]  %s298, 64, %s301, %s289
        $region32: #{tpu_custom_call.1} parent=27 // pred_fallthru
          _
        // Predicated region
        $region33: #{tpu_custom_call.1} parent=27 // pred_check
          %p304 = pneg %p88
        $region34: #{tpu_custom_call.1} parent=27 // pred_check_branch
          %306 = sbr.rel (%p304) target = $region36
        $region35: #{tpu_custom_call.1} parent=27 // pred_region
          %s307 = sand.u32 %s26, 1
          %s308 = scalar_lea.sflag [#allocation7], %s307
          %s309 = sand.u32 %s78, 1
          %s310 = smul.addr %s309, 16
          %s311 = scalar_lea.vmem [#allocation6], %s310
          %s312 = smul.u32 4, %s34
          %s314 = ssub.s32 256, 256
          %315 = vsyncadd %s308, %s314
          %s316 = smul.addr %s33, 4
          %s317 = sadd.s32 %s312, %s316
          %s318 = smul.addr %s317, 64
          %s319 = scalar_lea.hbm %s2, %s318
          %s320 = sshll.u32 %s311, 4
          %s321 = int_to_ptr.vmem [resolvable:$true] %s320
          %326 = dma.hbm_to_vmem [thread:$0]  %s319, 256, %s321, %s308, 64, 64, 4
        $region36: #{tpu_custom_call.1} parent=27 // pred_fallthru
          _
        // Predicated region
        $region37: #{tpu_custom_call.1} parent=27 // pred_check
          %p327 = pneg %p116
        $region38: #{tpu_custom_call.1} parent=27 // pred_check_branch
          %329 = sbr.rel (%p327) target = $region40
        $region39: #{tpu_custom_call.1} parent=27 // pred_region
          %s330 = sand.u32 %s26, 1
          %s331 = scalar_lea.sflag [#allocation7], %s330
          %s332 = sand.u32 %s106, 1
          %s333 = smul.addr %s332, 32
          %s334 = scalar_lea.vmem [#allocation8], %s333
          %s335 = smul.u32 2, %s34
          %s337 = ssub.s32 512, 512
          %338 = vsyncadd %s331, %s337
          %s339 = smul.addr %s335, 4
          %s340 = smul.addr %s33, 8
          %s341 = sadd.s32 %s339, %s340
          %s342 = smul.addr %s341, 64
          %s343 = scalar_lea.hbm %s3, %s342
          %s344 = sshll.u32 %s334, 4
          %s345 = int_to_ptr.vmem [resolvable:$true] %s344
          %350 = dma.hbm_to_vmem [thread:$0]  %s343, 512, %s345, %s331, 64, 64, 4
        $region40: #{tpu_custom_call.1} parent=27 // pred_fallthru
          _
      $region28: #{tpu_custom_call.1} parent=5 // pred_fallthru
        _
      %p351 = scmp.le.s32.totalorder 1, %s26
      %p352 = scmp.lt.s32.totalorder %s26, 3
      %p353 = pnand %p351, %p352
      %p354 = pneg %p353
      // Predicated region
      $region41: #{tpu_custom_call.1} parent=5 // pred_check
        _
      $region42: #{tpu_custom_call.1} parent=5 // pred_check_branch
        %356 = sbr.rel (%p353) target = $region44
      $region43: #{tpu_custom_call.1} parent=5 // pred_region
        %s357 = ssub.s32 %s26, 1
        %s358 = sand.u32 %s53, 1
        %s359 = scalar_lea.sflag [#allocation5], %s358
        %s360 = sand.u32 %s53, 1
        %s361 = smul.addr %s360, 4
        %s362 = scalar_lea.vmem [#allocation4], %s361
        // Predicated region
        $region45: #{tpu_custom_call.1} parent=43 // pred_check
          %p363 = pneg %p66
        $region46: #{tpu_custom_call.1} parent=43 // pred_check_branch
          %365 = sbr.rel (%p363) target = $region48
        $region47: #{tpu_custom_call.1} parent=43 // pred_region
          %366 = dma.done %s359, 64
        $region48: #{tpu_custom_call.1} parent=43 // pred_fallthru
          _
        %s367 = sand.u32 %s31, 1
        %s368 = scalar_lea.sflag [#allocation7], %s367
        %s369 = sand.u32 %s81, 1
        %s370 = smul.addr %s369, 16
        %s371 = scalar_lea.vmem [#allocation6], %s370
        // Predicated region
        $region49: #{tpu_custom_call.1} parent=43 // pred_check
          %p372 = pneg %p94
        $region50: #{tpu_custom_call.1} parent=43 // pred_check_branch
          %374 = sbr.rel (%p372) target = $region52
        $region51: #{tpu_custom_call.1} parent=43 // pred_region
          %375 = dma.done %s368, 256
        $region52: #{tpu_custom_call.1} parent=43 // pred_fallthru
          _
        %s376 = sand.u32 %s31, 1
        %s377 = scalar_lea.sflag [#allocation7], %s376
        %s378 = sand.u32 %s109, 1
        %s379 = smul.addr %s378, 32
        %s380 = scalar_lea.vmem [#allocation8], %s379
        // Predicated region
        $region53: #{tpu_custom_call.1} parent=43 // pred_check
          %p381 = pneg %p122
        $region54: #{tpu_custom_call.1} parent=43 // pred_check_branch
          %383 = sbr.rel (%p381) target = $region56
        $region55: #{tpu_custom_call.1} parent=43 // pred_region
          %384 = dma.done %s377, 512
        $region56: #{tpu_custom_call.1} parent=43 // pred_fallthru
          _
        // Predicated region
        $region57: #{tpu_custom_call.1} parent=43 // pred_check
          %p385 = pneg %p143
        $region58: #{tpu_custom_call.1} parent=43 // pred_check_branch
          %387 = sbr.rel (%p385) target = $region60
        $region59: #{tpu_custom_call.1} parent=43 // pred_region
          %388 = dma.done [#allocation10], 1536
        $region60: #{tpu_custom_call.1} parent=43 // pred_fallthru
          _
        // Predicated region
        $region61: #{tpu_custom_call.1} parent=43 // pred_check
          %p389 = pneg %p164
        $region62: #{tpu_custom_call.1} parent=43 // pred_check_branch
          %391 = sbr.rel (%p389) target = $region64
        $region63: #{tpu_custom_call.1} parent=43 // pred_region
          %392 = dma.done [#allocation10], 768
        $region64: #{tpu_custom_call.1} parent=43 // pred_fallthru
          _
        %s393 = sand.u32 %s53, 1
        %s394 = scalar_lea.sflag [#allocation5], %s393
        %s395 = sand.u32 %s53, 1
        %s396 = smul.addr %s395, 4
        %s397 = scalar_lea.vmem [#allocation4], %s396
        %p398 = pneg %p66
        %p399 = pneg %p63
        %s400 = sand.u32 %s31, 1
        %s401 = scalar_lea.sflag [#allocation7], %s400
        %s402 = sand.u32 %s81, 1
        %s403 = smul.addr %s402, 16
        %s404 = scalar_lea.vmem [#allocation6], %s403
        %p405 = pneg %p94
        %p406 = pneg %p91
        %s407 = sand.u32 %s31, 1
        %s408 = scalar_lea.sflag [#allocation7], %s407
        %s409 = sand.u32 %s109, 1
        %s410 = smul.addr %s409, 32
        %s411 = scalar_lea.vmem [#allocation8], %s410
        %p412 = pneg %p122
        %p413 = pneg %p119
        %p414 = pneg %p143
        %p415 = pneg %p140
        %p416 = pneg %p164
        %p417 = pneg %p161
        %p418 = pneg %p185
        %p419 = pneg %p182
        %p420 = pneg %p211
        %p421 = pneg %p208
        %p422 = scmp.lt.s32.totalorder %s35, 1
        %s423 = scalar_select %p422, %s35, 1
        %s424 = scalar_lea.vmem %s7, %s423
        %p425 = pneg %p237
        %p426 = pneg %p234
        %p427 = scmp.lt.s32.totalorder %s35, 1
        %s428 = scalar_select %p427, %s35, 1
        %s429 = scalar_lea.vmem %s8, %s428
        %s430 = smul.u32 4, %s36
        %s431 = smul.u32 2, %s36
        %p432 = scmp.lt.s32.totalorder %s35, 1
        %s433 = scalar_select %p432, %s35, 1
        %s434 = scalar_lea.vmem %s7, %s433
        %p435 = scmp.lt.s32.totalorder %s35, 1
        %s436 = scalar_select %p435, %s35, 1
        %s437 = scalar_lea.vmem %s8, %s436
        %p439 = scmp.eq.s32.totalorder %s36, 0
        // Predicated region
        $region65: #{tpu_custom_call.1} parent=43 // pred_check
          %p440 = pneg %p439
        $region66: #{tpu_custom_call.1} parent=43 // pred_check_branch
          %442 = sbr.rel (%p440) target = $region68
        $region67: #{tpu_custom_call.1} parent=43 // pred_region
          %vm443 = vcmask 0
          %444 = vst.msk [vmem:[%s434] sm:$0x1] %vm443, 0.0
          %445 = vst.msk [vmem:[%s437] sm:$0x1] %vm443, 0.0
        $region68: #{tpu_custom_call.1} parent=43 // pred_fallthru
          _
        %s446 = sld [smem:[#allocation3 + %s35]]
        %s447 = smul.u32 %s36, 2
        %p448 = scmp.lt.s32.totalorder %s447, %s446
        // Predicated region
        $region69: #{tpu_custom_call.1} parent=43 // pred_check
          %p449 = pneg %p448
        $region70: #{tpu_custom_call.1} parent=43 // pred_check_branch
          %451 = sbr.rel (%p449) target = $region72
        $region71: #{tpu_custom_call.1} parent=43 // pred_region
          %v452 = vld [vmem:[%s362] sm:$0xf]
          %v453 = vld [vmem:[%s371] sm:$0xf]
          %v454 = vld [vmem:[%s371 + $0x4] sm:$0xf]
          %v455 = vld [vmem:[%s371 + $0x8] sm:$0xf]
          %v456 = vld [vmem:[%s371 + $0xc] sm:$0xf]
          %v457 = vld [vmem:[#allocation9] sm:$0xff]
          %v458 = vld [vmem:[#allocation9 + $0x8] sm:$0xff]
          %v459 = vld [vmem:[#allocation9 + $0x10] sm:$0xff]
          %v460 = vld [vmem:[#allocation9 + $0x18] sm:$0xff]
          %v461 = vld [vmem:[#allocation9 + $0x20] sm:$0xff]
          %v462 = vld [vmem:[#allocation9 + $0x28] sm:$0xff]
          %v463 = vld [vmem:[#allocation9 + $0x30] sm:$0xff]
          %v464 = vld [vmem:[#allocation9 + $0x38] sm:$0xff]
          %v465 = vld [vmem:[#allocation9 + $0x40] sm:$0xff]
          %v466 = vld [vmem:[#allocation9 + $0x48] sm:$0xff]
          %v467 = vld [vmem:[#allocation9 + $0x50] sm:$0xff]
          %v468 = vld [vmem:[#allocation9 + $0x58] sm:$0xff]
          %v481 = vunpack.c.l.b16 %v457
          %v482 = vunpack.c.h.b16 %v457
          %v483 = vunpack.c.l.b16 %v458
          %v484 = vunpack.c.h.b16 %v458
          %v485 = vunpack.c.l.b16 %v459
          %v486 = vunpack.c.h.b16 %v459
          %v487 = vunpack.c.l.b16 %v460
          %v488 = vunpack.c.h.b16 %v460
          %v489 = vunpack.c.l.b16 %v461
          %v490 = vunpack.c.h.b16 %v461
          %v491 = vunpack.c.l.b16 %v462
          %v492 = vunpack.c.h.b16 %v462
          %v493 = vunpack.c.l.b16 %v463
          %v494 = vunpack.c.h.b16 %v463
          %v495 = vunpack.c.l.b16 %v464
          %v496 = vunpack.c.h.b16 %v464
          %v497 = vunpack.c.l.b16 %v465
          %v498 = vunpack.c.h.b16 %v465
          %v499 = vunpack.c.l.b16 %v466
          %v500 = vunpack.c.h.b16 %v466
          %v501 = vunpack.c.l.b16 %v467
          %v502 = vunpack.c.h.b16 %v467
          %v503 = vunpack.c.l.b16 %v468
          %v504 = vunpack.c.h.b16 %v468
          %v505 = vpack.c.b16 %v487, %v481
          %v506 = vpack.c.b16 %v488, %v482
          %v507 = vpack.c.b16 %v489, %v483
          %v508 = vpack.c.b16 %v490, %v484
          %v509 = vpack.c.b16 %v491, %v485
          %v510 = vpack.c.b16 %v492, %v486
          %v511 = vpack.c.b16 %v499, %v493
          %v512 = vpack.c.b16 %v500, %v494
          %v513 = vpack.c.b16 %v501, %v495
          %v514 = vpack.c.b16 %v502, %v496
          %v515 = vpack.c.b16 %v503, %v497
          %v516 = vpack.c.b16 %v504, %v498
          %vm529 = vcmask 261120
          %v531 = vsel %vm529, %v452, 0
          %533 = vmatprep.subr.bf16.mxu0 %v506
          %534 = vmatpush1.bf16.msra.mxu0 %v505
          %535 = vmatprep.subr.bf16.mxu0 %v512
          %536 = vmatpush1.bf16.msra.mxu0 %v511
          %537 = vmatprep.subr.bf16.mxu0 0
          %538 = vmatpush1.bf16.msra.mxu0 0
          %539 = vmatprep.subr.bf16.mxu0 0
          %540 = vmatpush1.bf16.msra.mxu0 0
          %541 = vmatprep.subr.bf16.mxu0 0
          %542 = vmatpush1.bf16.msra.mxu0 0
          %543 = vmatprep.subr.bf16.mxu0 0
          %544 = vmatpush1.bf16.msra.mxu0 0
          %545 = vmatprep.subr.bf16.mxu0 0
          %546 = vmatpush1.bf16.msra.mxu0 0
          %547 = vmatprep.subr.bf16.mxu0 0
          %548 = vmatpush1.bf16.msra.mxu0 0
          %549 = vmatprep.subr.bf16.mxu0 0
          %550 = vmatpush1.bf16.msra.mxu0 0
          %551 = vmatprep.subr.bf16.mxu0 0
          %552 = vmatpush1.bf16.msra.mxu0 0
          %553 = vmatprep.subr.bf16.mxu0 0
          %554 = vmatpush1.bf16.msra.mxu0 0
          %555 = vmatprep.subr.bf16.mxu0 0
          %556 = vmatpush1.bf16.msra.mxu0 0
          %557 = vmatprep.subr.bf16.mxu0 0
          %558 = vmatpush1.bf16.msra.mxu0 0
          %559 = vmatprep.subr.bf16.mxu0 0
          %560 = vmatpush1.bf16.msra.mxu0 0
          %561 = vmatprep.subr.bf16.mxu0 0
          %562 = vmatpush1.bf16.msra.mxu0 0
          %563 = vmatprep.subr.bf16.mxu0 0
          %564 = vmatpush1.bf16.msra.mxu0 0
          %565 = vmatprep.mubr.bf16.mxu0 0
          %566 = vmatmul.mubr.bf16.gmra.mrb[0].mxu0 %v531
          %v567 = vpop.f32.mrb[0].mxu0
          %v568 = vadd.f32 0.0, %v567
          %v569 = vpop.f32.mrb[0].mxu0
          %v570 = vadd.f32 0.0, %v569
          %v571 = vpop.f32.mrb[0].mxu0
          %v572 = vpop.f32.mrb[0].mxu0
          %573 = vdwg.mxu0
          %574 = vmatprep.subr.bf16.mxu0 %v508
          %575 = vmatpush1.bf16.msra.mxu0 %v507
          %576 = vmatprep.subr.bf16.mxu0 %v514
          %577 = vmatpush1.bf16.msra.mxu0 %v513
          %578 = vmatprep.subr.bf16.mxu0 0
          %579 = vmatpush1.bf16.msra.mxu0 0
          %580 = vmatprep.subr.bf16.mxu0 0
          %581 = vmatpush1.bf16.msra.mxu0 0
          %582 = vmatprep.subr.bf16.mxu0 0
          %583 = vmatpush1.bf16.msra.mxu0 0
          %584 = vmatprep.subr.bf16.mxu0 0
          %585 = vmatpush1.bf16.msra.mxu0 0
          %586 = vmatprep.subr.bf16.mxu0 0
          %587 = vmatpush1.bf16.msra.mxu0 0
          %588 = vmatprep.subr.bf16.mxu0 0
          %589 = vmatpush1.bf16.msra.mxu0 0
          %590 = vmatprep.subr.bf16.mxu0 0
          %591 = vmatpush1.bf16.msra.mxu0 0
          %592 = vmatprep.subr.bf16.mxu0 0
          %593 = vmatpush1.bf16.msra.mxu0 0
          %594 = vmatprep.subr.bf16.mxu0 0
          %595 = vmatpush1.bf16.msra.mxu0 0
          %596 = vmatprep.subr.bf16.mxu0 0
          %597 = vmatpush1.bf16.msra.mxu0 0
          %598 = vmatprep.subr.bf16.mxu0 0
          %599 = vmatpush1.bf16.msra.mxu0 0
          %600 = vmatprep.subr.bf16.mxu0 0
          %601 = vmatpush1.bf16.msra.mxu0 0
          %602 = vmatprep.subr.bf16.mxu0 0
          %603 = vmatpush1.bf16.msra.mxu0 0
          %604 = vmatprep.subr.bf16.mxu0 0
          %605 = vmatpush1.bf16.msra.mxu0 0
          %606 = vmatprep.mubr.bf16.mxu0 0
          %607 = vmatmul.mubr.bf16.gmra.mrb[0].mxu0 %v531
          %v608 = vpop.f32.mrb[0].mxu0
          %v609 = vadd.f32 0.0, %v608
          %v610 = vpop.f32.mrb[0].mxu0
          %v611 = vadd.f32 0.0, %v610
          %v612 = vpop.f32.mrb[0].mxu0
          %v613 = vpop.f32.mrb[0].mxu0
          %614 = vdwg.mxu0
          %615 = vmatprep.subr.bf16.mxu0 %v510
          %616 = vmatpush1.bf16.msra.mxu0 %v509
          %617 = vmatprep.subr.bf16.mxu0 %v516
          %618 = vmatpush1.bf16.msra.mxu0 %v515
          %619 = vmatprep.subr.bf16.mxu0 0
          %620 = vmatpush1.bf16.msra.mxu0 0
          %621 = vmatprep.subr.bf16.mxu0 0
          %622 = vmatpush1.bf16.msra.mxu0 0
          %623 = vmatprep.subr.bf16.mxu0 0
          %624 = vmatpush1.bf16.msra.mxu0 0
          %625 = vmatprep.subr.bf16.mxu0 0
          %626 = vmatpush1.bf16.msra.mxu0 0
          %627 = vmatprep.subr.bf16.mxu0 0
          %628 = vmatpush1.bf16.msra.mxu0 0
          %629 = vmatprep.subr.bf16.mxu0 0
          %630 = vmatpush1.bf16.msra.mxu0 0
          %631 = vmatprep.subr.bf16.mxu0 0
          %632 = vmatpush1.bf16.msra.mxu0 0
          %633 = vmatprep.subr.bf16.mxu0 0
          %634 = vmatpush1.bf16.msra.mxu0 0
          %635 = vmatprep.subr.bf16.mxu0 0
          %636 = vmatpush1.bf16.msra.mxu0 0
          %637 = vmatprep.subr.bf16.mxu0 0
          %638 = vmatpush1.bf16.msra.mxu0 0
          %639 = vmatprep.subr.bf16.mxu0 0
          %640 = vmatpush1.bf16.msra.mxu0 0
          %641 = vmatprep.subr.bf16.mxu0 0
          %642 = vmatpush1.bf16.msra.mxu0 0
          %643 = vmatprep.subr.bf16.mxu0 0
          %644 = vmatpush1.bf16.msra.mxu0 0
          %645 = vmatprep.subr.bf16.mxu0 0
          %646 = vmatpush1.bf16.msra.mxu0 0
          %647 = vmatprep.mubr.bf16.mxu0 0
          %648 = vmatmul.mubr.bf16.gmra.mrb[0].mxu0 %v531
          %v649 = vpop.f32.mrb[0].mxu0
          %v650 = vadd.f32 0.0, %v649
          %v651 = vpop.f32.mrb[0].mxu0
          %v652 = vadd.f32 0.0, %v651
          %v653 = vpop.f32.mrb[0].mxu0
          %v654 = vpop.f32.mrb[0].mxu0
          %655 = vdwg.mxu0
          %v656 = vld [vmem:[#allocation11] sm:$0xff]
          %v657 = vld [vmem:[#allocation11 + $0x8] sm:$0xf]
          %v658 = vld [vmem:[#allocation11 + $0xc] sm:$0xff]
          %v659 = vld [vmem:[#allocation11 + $0x14] sm:$0xf]
          %v660 = vld [vmem:[#allocation11 + $0x18] sm:$0xff]
          %v661 = vld [vmem:[#allocation11 + $0x20] sm:$0xf]
          %v662 = vld [vmem:[#allocation11 + $0x24] sm:$0xff]
          %v663 = vld [vmem:[#allocation11 + $0x2c] sm:$0xf]
          %v668 = vunpack.c.l.b16 %v453
          %v669 = vunpack.c.l.b16 %v454
          %v670 = vunpack.c.l.b16 %v455
          %v671 = vunpack.c.l.b16 %v456
          %v672 = vpack.c.b16 %v669, %v668
          %v673 = vpack.c.b16 %v671, %v670
          %v682 = vunpack.c.l.b16 %v656
          %v683 = vunpack.c.h.b16 %v656
          %v684 = vunpack.c.l.b16 %v657
          %v685 = vunpack.c.l.b16 %v658
          %v686 = vunpack.c.h.b16 %v658
          %v687 = vunpack.c.l.b16 %v659
          %v688 = vunpack.c.l.b16 %v660
          %v689 = vunpack.c.h.b16 %v660
          %v690 = vunpack.c.l.b16 %v661
          %v691 = vunpack.c.l.b16 %v662
          %v692 = vunpack.c.h.b16 %v662
          %v693 = vunpack.c.l.b16 %v663
          %v694 = vpack.c.b16 %v685, %v682
          %v695 = vpack.c.b16 %v686, %v683
          %v696 = vpack.c.b16 %v687, %v684
          %v697 = vpack.c.b16 %v691, %v688
          %v698 = vpack.c.b16 %v692, %v689
          %v699 = vpack.c.b16 %v693, %v690
          %v707 = vsel %vm529, %v672, 0
          %v710 = vsel %vm529, %v673, 0
          %712 = vmatprep.subr.bf16.mxu0 %v695
          %713 = vmatpush1.bf16.msra.mxu0 %v694
          %714 = vmatprep.subr.bf16.mxu0 %v698
          %715 = vmatpush1.bf16.msra.mxu0 %v697
          %716 = vmatprep.subr.bf16.mxu0 0
          %717 = vmatpush1.bf16.msra.mxu0 0
          %718 = vmatprep.subr.bf16.mxu0 0
          %719 = vmatpush1.bf16.msra.mxu0 0
          %720 = vmatprep.subr.bf16.mxu0 0
          %721 = vmatpush1.bf16.msra.mxu0 0
          %722 = vmatprep.subr.bf16.mxu0 0
          %723 = vmatpush1.bf16.msra.mxu0 0
          %724 = vmatprep.subr.bf16.mxu0 0
          %725 = vmatpush1.bf16.msra.mxu0 0
          %726 = vmatprep.subr.bf16.mxu0 0
          %727 = vmatpush1.bf16.msra.mxu0 0
          %728 = vmatprep.subr.bf16.mxu0 0
          %729 = vmatpush1.bf16.msra.mxu0 0
          %730 = vmatprep.subr.bf16.mxu0 0
          %731 = vmatpush1.bf16.msra.mxu0 0
          %732 = vmatprep.subr.bf16.mxu0 0
          %733 = vmatpush1.bf16.msra.mxu0 0
          %734 = vmatprep.subr.bf16.mxu0 0
          %735 = vmatpush1.bf16.msra.mxu0 0
          %736 = vmatprep.subr.bf16.mxu0 0
          %737 = vmatpush1.bf16.msra.mxu0 0
          %738 = vmatprep.subr.bf16.mxu0 0
          %739 = vmatpush1.bf16.msra.mxu0 0
          %740 = vmatprep.subr.bf16.mxu0 0
          %741 = vmatpush1.bf16.msra.mxu0 0
          %742 = vmatprep.subr.bf16.mxu0 0
          %743 = vmatpush1.bf16.msra.mxu0 0
          %744 = vmatprep.mubr.bf16.mxu0 0
          %745 = vmatmul.mubr.bf16.gmra.mrb[0].mxu0 %v707
          %v746 = vpop.f32.mrb[0].mxu0
          %v747 = vadd.f32 0.0, %v746
          %v748 = vpop.f32.mrb[0].mxu0
          %v749 = vadd.f32 0.0, %v748
          %v750 = vpop.f32.mrb[0].mxu0
          %v751 = vadd.f32 0.0, %v750
          %v752 = vpop.f32.mrb[0].mxu0
          %v753 = vadd.f32 0.0, %v752
          %754 = vmatprep.mubr.bf16.mxu0 0
          %755 = vmatmul.mubr.bf16.gmra.mrb[0].mxu0 %v710
          %v756 = vpop.f32.mrb[0].mxu0
          %v757 = vadd.f32 0.0, %v756
          %v758 = vpop.f32.mrb[0].mxu0
          %v759 = vadd.f32 0.0, %v758
          %v760 = vpop.f32.mrb[0].mxu0
          %v761 = vadd.f32 0.0, %v760
          %v762 = vpop.f32.mrb[0].mxu0
          %v763 = vadd.f32 0.0, %v762
          %764 = vdwg.mxu0
          %765 = vmatprep.subr.bf16.mxu0 0
          %766 = vmatpush1.bf16.msra.mxu0 %v696
          %767 = vmatprep.subr.bf16.mxu0 0
          %768 = vmatpush1.bf16.msra.mxu0 %v699
          %769 = vmatprep.subr.bf16.mxu0 0
          %770 = vmatpush1.bf16.msra.mxu0 0
          %771 = vmatprep.subr.bf16.mxu0 0
          %772 = vmatpush1.bf16.msra.mxu0 0
          %773 = vmatprep.subr.bf16.mxu0 0
          %774 = vmatpush1.bf16.msra.mxu0 0
          %775 = vmatprep.subr.bf16.mxu0 0
          %776 = vmatpush1.bf16.msra.mxu0 0
          %777 = vmatprep.subr.bf16.mxu0 0
          %778 = vmatpush1.bf16.msra.mxu0 0
          %779 = vmatprep.subr.bf16.mxu0 0
          %780 = vmatpush1.bf16.msra.mxu0 0
          %781 = vmatprep.subr.bf16.mxu0 0
          %782 = vmatpush1.bf16.msra.mxu0 0
          %783 = vmatprep.subr.bf16.mxu0 0
          %784 = vmatpush1.bf16.msra.mxu0 0
          %785 = vmatprep.subr.bf16.mxu0 0
          %786 = vmatpush1.bf16.msra.mxu0 0
          %787 = vmatprep.subr.bf16.mxu0 0
          %788 = vmatpush1.bf16.msra.mxu0 0
          %789 = vmatprep.subr.bf16.mxu0 0
          %790 = vmatpush1.bf16.msra.mxu0 0
          %791 = vmatprep.subr.bf16.mxu0 0
          %792 = vmatpush1.bf16.msra.mxu0 0
          %793 = vmatprep.subr.bf16.mxu0 0
          %794 = vmatpush1.bf16.msra.mxu0 0
          %795 = vmatprep.subr.bf16.mxu0 0
          %796 = vmatpush1.bf16.msra.mxu0 0
          %797 = vmatprep.mubr.bf16.mxu0 0
          %798 = vmatmul.mubr.bf16.gmra.mrb[0].mxu0 %v707
          %v799 = vpop.f32.mrb[0].mxu0
          %v800 = vadd.f32 0.0, %v799
          %v801 = vpop.f32.mrb[0].mxu0
          %v802 = vpop.f32.mrb[0].mxu0
          %v803 = vadd.f32 0.0, %v802
          %v804 = vpop.f32.mrb[0].mxu0
          %805 = vmatprep.mubr.bf16.mxu0 0
          %806 = vmatmul.mubr.bf16.gmra.mrb[0].mxu0 %v710
          %v807 = vpop.f32.mrb[0].mxu0
          %v808 = vadd.f32 0.0, %v807
          %v809 = vpop.f32.mrb[0].mxu0
          %v810 = vpop.f32.mrb[0].mxu0
          %v811 = vadd.f32 0.0, %v810
          %v812 = vpop.f32.mrb[0].mxu0
          %813 = vdwg.mxu0
          %v817 = vcombine.low %v568, %v570
          %v818 = vcombine.high %v568, %v570
          %v819 = vcombine.high %v609, %v609
          %v821 = vunpack.c.l.s4 1966171168
          %v822 = vunpack.c.0.s8 %v821
          %v823 = vlaneseq
          %v824 = vshrl.u32 %v823, 7
          %v825 = vsub.s32 %v822, %v824
          %v826 = vrot.slane %v817, %v825
          %v828 = vunpack.c.l.s4 1966171168
          %v829 = vunpack.c.0.s8 %v828
          %v830 = vlaneseq
          %v831 = vshrl.u32 %v830, 7
          %v832 = vsub.s32 %v829, %v831
          %v833 = vrot.slane %v818, %v832
          %v835 = vunpack.c.l.s4 1966171168
          %v836 = vunpack.c.0.s8 %v835
          %v837 = vlaneseq
          %v838 = vshrl.u32 %v837, 7
          %v839 = vsub.s32 %v836, %v838
          %v840 = vrot.slane %v609, %v839
          %v842 = vunpack.c.l.s4 1966171168
          %v843 = vunpack.c.0.s8 %v842
          %v844 = vlaneseq
          %v845 = vshrl.u32 %v844, 7
          %v846 = vsub.s32 %v843, %v845
          %v847 = vrot.slane %v819, %v846
          %v848 = vcombine.low %v826, %v840
          %v849 = vcombine.high %v826, %v840
          %v850 = vcombine.low %v833, %v847
          %v851 = vcombine.high %v833, %v847
          %v853 = vunpack.c.l.s4 1966171168
          %v854 = vunpack.c.0.s8 %v853
          %v855 = vlaneseq
          %v856 = vshrl.u32 %v855, 7
          %v857 = vsub.s32 %v854, %v856
          %v858 = vrot.slane %v848, %v857
          %v860 = vunpack.c.l.s4 1966171168
          %v861 = vunpack.c.0.s8 %v860
          %v862 = vlaneseq
          %v863 = vshrl.u32 %v862, 7
          %v864 = vsub.s32 %v861, %v863
          %v865 = vrot.slane %v850, %v864
          %v867 = vunpack.c.l.s4 1966171168
          %v868 = vunpack.c.0.s8 %v867
          %v869 = vlaneseq
          %v870 = vshrl.u32 %v869, 7
          %v871 = vsub.s32 %v868, %v870
          %v872 = vrot.slane %v849, %v871
          %v874 = vunpack.c.l.s4 1966171168
          %v875 = vunpack.c.0.s8 %v874
          %v876 = vlaneseq
          %v877 = vshrl.u32 %v876, 7
          %v878 = vsub.s32 %v875, %v877
          %v879 = vrot.slane %v851, %v878
          %v880 = vcombine.high %v858, %v858
          %v881 = vcombine.high %v865, %v865
          %v882 = vcombine.high %v872, %v872
          %v883 = vcombine.high %v879, %v879
          %v887 = vcombine.low %v611, %v650
          %v888 = vcombine.high %v611, %v650
          %v889 = vcombine.high %v652, %v652
          %v905 = vcombine.low %v747, %v749
          %v906 = vcombine.high %v747, %v749
          %v907 = vcombine.high %v800, %v800
          %v908 = vcombine.low %v751, %v753
          %v909 = vcombine.high %v751, %v753
          %v910 = vcombine.high %v803, %v803
          %v911 = vcombine.low %v757, %v759
          %v912 = vcombine.high %v757, %v759
          %v913 = vcombine.high %v808, %v808
          %v914 = vcombine.low %v761, %v763
          %v915 = vcombine.high %v761, %v763
          %v916 = vcombine.high %v811, %v811
          %v929 = vsub.f32 %v887, %v905
          %v930 = vsub.f32 %v652, %v800
          %v931 = vsub.f32 %v887, %v906
          %v932 = vsub.f32 %v652, %v907
          %v933 = vsub.f32 %v887, %v908
          %v934 = vsub.f32 %v652, %v803
          %v935 = vsub.f32 %v887, %v909
          %v936 = vsub.f32 %v652, %v910
          %v937 = vsub.f32 %v888, %v911
          %v938 = vsub.f32 %v889, %v808
          %v939 = vsub.f32 %v888, %v912
          %v940 = vsub.f32 %v889, %v913
          %v941 = vsub.f32 %v888, %v914
          %v942 = vsub.f32 %v889, %v811
          %v943 = vsub.f32 %v888, %v915
          %v944 = vsub.f32 %v889, %v916
          %v945 = vld [vmem:[%s6] sm:$0x7]
          %v947 = vlaneseq
          %v948 = vshrl.u32 %v947, 7
          %v949 = vsub.s32 0, %v948
          %v950 = vrot.slane %v945, %v949
          %v951 = vlaneseq
          %v952 = vshrl.u32 %v951, 7
          %v953 = vsub.s32 1, %v952
          %v954 = vrot.slane %v945, %v953
          %v955 = vlaneseq
          %v956 = vshrl.u32 %v955, 7
          %v957 = vsub.s32 2, %v956
          %v958 = vrot.slane %v945, %v957
          %v960 = vcombine.low %v950, %v954
          %v962 = vadd.f32 %v929, %v960
          %v963 = vadd.f32 %v930, %v958
          %v964 = vadd.f32 %v931, %v960
          %v965 = vadd.f32 %v932, %v958
          %v966 = vadd.f32 %v933, %v960
          %v967 = vadd.f32 %v934, %v958
          %v968 = vadd.f32 %v935, %v960
          %v969 = vadd.f32 %v936, %v958
          %v970 = vadd.f32 %v937, %v960
          %v971 = vadd.f32 %v938, %v958
          %v972 = vadd.f32 %v939, %v960
          %v973 = vadd.f32 %v940, %v958
          %v974 = vadd.f32 %v941, %v960
          %v975 = vadd.f32 %v942, %v958
          %v976 = vadd.f32 %v943, %v960
          %v977 = vadd.f32 %v944, %v958
          %v978 = vlaneseq
          %v979 = vshrl.u32 %v978, 7
          %v980 = vsub.s32 0, %v979
          %v981 = vrot.slane %v858, %v980
          %v982 = vlaneseq
          %v983 = vshrl.u32 %v982, 7
          %v984 = vsub.s32 1, %v983
          %v985 = vrot.slane %v858, %v984
          %v986 = vlaneseq
          %v987 = vshrl.u32 %v986, 7
          %v988 = vsub.s32 2, %v987
          %v989 = vrot.slane %v858, %v988
          %v990 = vlaneseq
          %v991 = vshrl.u32 %v990, 7
          %v992 = vsub.s32 0, %v991
          %v993 = vrot.slane %v872, %v992
          %v994 = vlaneseq
          %v995 = vshrl.u32 %v994, 7
          %v996 = vsub.s32 1, %v995
          %v997 = vrot.slane %v872, %v996
          %v998 = vlaneseq
          %v999 = vshrl.u32 %v998, 7
          %v1000 = vsub.s32 2, %v999
          %v1001 = vrot.slane %v872, %v1000
          %v1002 = vlaneseq
          %v1003 = vshrl.u32 %v1002, 7
          %v1004 = vsub.s32 0, %v1003
          %v1005 = vrot.slane %v880, %v1004
          %v1006 = vlaneseq
          %v1007 = vshrl.u32 %v1006, 7
          %v1008 = vsub.s32 1, %v1007
          %v1009 = vrot.slane %v880, %v1008
          %v1010 = vlaneseq
          %v1011 = vshrl.u32 %v1010, 7
          %v1012 = vsub.s32 2, %v1011
          %v1013 = vrot.slane %v880, %v1012
          %v1014 = vlaneseq
          %v1015 = vshrl.u32 %v1014, 7
          %v1016 = vsub.s32 0, %v1015
          %v1017 = vrot.slane %v882, %v1016
          %v1018 = vlaneseq
          %v1019 = vshrl.u32 %v1018, 7
          %v1020 = vsub.s32 1, %v1019
          %v1021 = vrot.slane %v882, %v1020
          %v1022 = vlaneseq
          %v1023 = vshrl.u32 %v1022, 7
          %v1024 = vsub.s32 2, %v1023
          %v1025 = vrot.slane %v882, %v1024
          %v1026 = vlaneseq
          %v1027 = vshrl.u32 %v1026, 7
          %v1028 = vsub.s32 0, %v1027
          %v1029 = vrot.slane %v865, %v1028
          %v1030 = vlaneseq
          %v1031 = vshrl.u32 %v1030, 7
          %v1032 = vsub.s32 1, %v1031
          %v1033 = vrot.slane %v865, %v1032
          %v1034 = vlaneseq
          %v1035 = vshrl.u32 %v1034, 7
          %v1036 = vsub.s32 2, %v1035
          %v1037 = vrot.slane %v865, %v1036
          %v1038 = vlaneseq
          %v1039 = vshrl.u32 %v1038, 7
          %v1040 = vsub.s32 0, %v1039
          %v1041 = vrot.slane %v879, %v1040
          %v1042 = vlaneseq
          %v1043 = vshrl.u32 %v1042, 7
          %v1044 = vsub.s32 1, %v1043
          %v1045 = vrot.slane %v879, %v1044
          %v1046 = vlaneseq
          %v1047 = vshrl.u32 %v1046, 7
          %v1048 = vsub.s32 2, %v1047
          %v1049 = vrot.slane %v879, %v1048
          %v1050 = vlaneseq
          %v1051 = vshrl.u32 %v1050, 7
          %v1052 = vsub.s32 0, %v1051
          %v1053 = vrot.slane %v881, %v1052
          %v1054 = vlaneseq
          %v1055 = vshrl.u32 %v1054, 7
          %v1056 = vsub.s32 1, %v1055
          %v1057 = vrot.slane %v881, %v1056
          %v1058 = vlaneseq
          %v1059 = vshrl.u32 %v1058, 7
          %v1060 = vsub.s32 2, %v1059
          %v1061 = vrot.slane %v881, %v1060
          %v1062 = vlaneseq
          %v1063 = vshrl.u32 %v1062, 7
          %v1064 = vsub.s32 0, %v1063
          %v1065 = vrot.slane %v883, %v1064
          %v1066 = vlaneseq
          %v1067 = vshrl.u32 %v1066, 7
          %v1068 = vsub.s32 1, %v1067
          %v1069 = vrot.slane %v883, %v1068
          %v1070 = vlaneseq
          %v1071 = vshrl.u32 %v1070, 7
          %v1072 = vsub.s32 2, %v1071
          %v1073 = vrot.slane %v883, %v1072
          %v1082 = vcombine.low %v981, %v985
          %v1083 = vcombine.low %v993, %v997
          %v1084 = vcombine.low %v1005, %v1009
          %v1085 = vcombine.low %v1017, %v1021
          %v1086 = vcombine.low %v1029, %v1033
          %v1087 = vcombine.low %v1041, %v1045
          %v1088 = vcombine.low %v1053, %v1057
          %v1089 = vcombine.low %v1065, %v1069
          %v1098 = vsub.f32 %v962, %v1082
          %v1099 = vsub.f32 %v963, %v989
          %v1100 = vsub.f32 %v964, %v1082
          %v1101 = vsub.f32 %v965, %v989
          %v1102 = vsub.f32 %v966, %v1082
          %v1103 = vsub.f32 %v967, %v989
          %v1104 = vsub.f32 %v968, %v1082
          %v1105 = vsub.f32 %v969, %v989
          %v1106 = vsub.f32 %v962, %v1083
          %v1107 = vsub.f32 %v963, %v1001
          %v1108 = vsub.f32 %v964, %v1083
          %v1109 = vsub.f32 %v965, %v1001
          %v1110 = vsub.f32 %v966, %v1083
          %v1111 = vsub.f32 %v967, %v1001
          %v1112 = vsub.f32 %v968, %v1083
          %v1113 = vsub.f32 %v969, %v1001
          %v1114 = vsub.f32 %v962, %v1084
          %v1115 = vsub.f32 %v963, %v1013
          %v1116 = vsub.f32 %v964, %v1084
          %v1117 = vsub.f32 %v965, %v1013
          %v1118 = vsub.f32 %v966, %v1084
          %v1119 = vsub.f32 %v967, %v1013
          %v1120 = vsub.f32 %v968, %v1084
          %v1121 = vsub.f32 %v969, %v1013
          %v1122 = vsub.f32 %v962, %v1085
          %v1123 = vsub.f32 %v963, %v1025
          %v1124 = vsub.f32 %v964, %v1085
          %v1125 = vsub.f32 %v965, %v1025
          %v1126 = vsub.f32 %v966, %v1085
          %v1127 = vsub.f32 %v967, %v1025
          %v1128 = vsub.f32 %v968, %v1085
          %v1129 = vsub.f32 %v969, %v1025
          %v1130 = vsub.f32 %v970, %v1086
          %v1131 = vsub.f32 %v971, %v1037
          %v1132 = vsub.f32 %v972, %v1086
          %v1133 = vsub.f32 %v973, %v1037
          %v1134 = vsub.f32 %v974, %v1086
          %v1135 = vsub.f32 %v975, %v1037
          %v1136 = vsub.f32 %v976, %v1086
          %v1137 = vsub.f32 %v977, %v1037
          %v1138 = vsub.f32 %v970, %v1087
          %v1139 = vsub.f32 %v971, %v1049
          %v1140 = vsub.f32 %v972, %v1087
          %v1141 = vsub.f32 %v973, %v1049
          %v1142 = vsub.f32 %v974, %v1087
          %v1143 = vsub.f32 %v975, %v1049
          %v1144 = vsub.f32 %v976, %v1087
          %v1145 = vsub.f32 %v977, %v1049
          %v1146 = vsub.f32 %v970, %v1088
          %v1147 = vsub.f32 %v971, %v1061
          %v1148 = vsub.f32 %v972, %v1088
          %v1149 = vsub.f32 %v973, %v1061
          %v1150 = vsub.f32 %v974, %v1088
          %v1151 = vsub.f32 %v975, %v1061
          %v1152 = vsub.f32 %v976, %v1088
          %v1153 = vsub.f32 %v977, %v1061
          %v1154 = vsub.f32 %v970, %v1089
          %v1155 = vsub.f32 %v971, %v1073
          %v1156 = vsub.f32 %v972, %v1089
          %v1157 = vsub.f32 %v973, %v1073
          %v1158 = vsub.f32 %v974, %v1089
          %v1159 = vsub.f32 %v975, %v1073
          %v1160 = vsub.f32 %v976, %v1089
          %v1161 = vsub.f32 %v977, %v1073
          %v1162 = vmul.f32 %v1098, %v1098
          %v1163 = vmul.f32 %v1099, %v1099
          %v1164 = vmul.f32 %v1100, %v1100
          %v1165 = vmul.f32 %v1101, %v1101
          %v1166 = vmul.f32 %v1102, %v1102
          %v1167 = vmul.f32 %v1103, %v1103
          %v1168 = vmul.f32 %v1104, %v1104
          %v1169 = vmul.f32 %v1105, %v1105
          %v1170 = vmul.f32 %v1106, %v1106
          %v1171 = vmul.f32 %v1107, %v1107
          %v1172 = vmul.f32 %v1108, %v1108
          %v1173 = vmul.f32 %v1109, %v1109
          %v1174 = vmul.f32 %v1110, %v1110
          %v1175 = vmul.f32 %v1111, %v1111
          %v1176 = vmul.f32 %v1112, %v1112
          %v1177 = vmul.f32 %v1113, %v1113
          %v1178 = vmul.f32 %v1114, %v1114
          %v1179 = vmul.f32 %v1115, %v1115
          %v1180 = vmul.f32 %v1116, %v1116
          %v1181 = vmul.f32 %v1117, %v1117
          %v1182 = vmul.f32 %v1118, %v1118
          %v1183 = vmul.f32 %v1119, %v1119
          %v1184 = vmul.f32 %v1120, %v1120
          %v1185 = vmul.f32 %v1121, %v1121
          %v1186 = vmul.f32 %v1122, %v1122
          %v1187 = vmul.f32 %v1123, %v1123
          %v1188 = vmul.f32 %v1124, %v1124
          %v1189 = vmul.f32 %v1125, %v1125
          %v1190 = vmul.f32 %v1126, %v1126
          %v1191 = vmul.f32 %v1127, %v1127
          %v1192 = vmul.f32 %v1128, %v1128
          %v1193 = vmul.f32 %v1129, %v1129
          %v1194 = vmul.f32 %v1130, %v1130
          %v1195 = vmul.f32 %v1131, %v1131
          %v1196 = vmul.f32 %v1132, %v1132
          %v1197 = vmul.f32 %v1133, %v1133
          %v1198 = vmul.f32 %v1134, %v1134
          %v1199 = vmul.f32 %v1135, %v1135
          %v1200 = vmul.f32 %v1136, %v1136
          %v1201 = vmul.f32 %v1137, %v1137
          %v1202 = vmul.f32 %v1138, %v1138
          %v1203 = vmul.f32 %v1139, %v1139
          %v1204 = vmul.f32 %v1140, %v1140
          %v1205 = vmul.f32 %v1141, %v1141
          %v1206 = vmul.f32 %v1142, %v1142
          %v1207 = vmul.f32 %v1143, %v1143
          %v1208 = vmul.f32 %v1144, %v1144
          %v1209 = vmul.f32 %v1145, %v1145
          %v1210 = vmul.f32 %v1146, %v1146
          %v1211 = vmul.f32 %v1147, %v1147
          %v1212 = vmul.f32 %v1148, %v1148
          %v1213 = vmul.f32 %v1149, %v1149
          %v1214 = vmul.f32 %v1150, %v1150
          %v1215 = vmul.f32 %v1151, %v1151
          %v1216 = vmul.f32 %v1152, %v1152
          %v1217 = vmul.f32 %v1153, %v1153
          %v1218 = vmul.f32 %v1154, %v1154
          %v1219 = vmul.f32 %v1155, %v1155
          %v1220 = vmul.f32 %v1156, %v1156
          %v1221 = vmul.f32 %v1157, %v1157
          %v1222 = vmul.f32 %v1158, %v1158
          %v1223 = vmul.f32 %v1159, %v1159
          %v1224 = vmul.f32 %v1160, %v1160
          %v1225 = vmul.f32 %v1161, %v1161
          %v1258 = vcombine.high %v1162, %v1162
          %v1259 = vcombine.high %v1164, %v1164
          %v1260 = vcombine.high %v1166, %v1166
          %v1261 = vcombine.high %v1168, %v1168
          %v1262 = vcombine.high %v1170, %v1170
          %v1263 = vcombine.high %v1172, %v1172
          %v1264 = vcombine.high %v1174, %v1174
          %v1265 = vcombine.high %v1176, %v1176
          %v1266 = vcombine.high %v1178, %v1178
          %v1267 = vcombine.high %v1180, %v1180
          %v1268 = vcombine.high %v1182, %v1182
          %v1269 = vcombine.high %v1184, %v1184
          %v1270 = vcombine.high %v1186, %v1186
          %v1271 = vcombine.high %v1188, %v1188
          %v1272 = vcombine.high %v1190, %v1190
          %v1273 = vcombine.high %v1192, %v1192
          %v1274 = vcombine.high %v1194, %v1194
          %v1275 = vcombine.high %v1196, %v1196
          %v1276 = vcombine.high %v1198, %v1198
          %v1277 = vcombine.high %v1200, %v1200
          %v1278 = vcombine.high %v1202, %v1202
          %v1279 = vcombine.high %v1204, %v1204
          %v1280 = vcombine.high %v1206, %v1206
          %v1281 = vcombine.high %v1208, %v1208
          %v1282 = vcombine.high %v1210, %v1210
          %v1283 = vcombine.high %v1212, %v1212
          %v1284 = vcombine.high %v1214, %v1214
          %v1285 = vcombine.high %v1216, %v1216
          %v1286 = vcombine.high %v1218, %v1218
          %v1287 = vcombine.high %v1220, %v1220
          %v1288 = vcombine.high %v1222, %v1222
          %v1289 = vcombine.high %v1224, %v1224
          %vm1322 = vcmask 1043456
          %v1323 = vsel %vm1322, %v1162, 0.0
          %v1324 = vsel %vm1322, %v1258, 0.0
          %v1325 = vadd.f32 %v1323, %v1324
          %v1326 = vsel %vm1322, %v1163, 0.0
          %v1327 = vadd.f32 %v1325, %v1326
          %1328 = vadd.xlane.f32.xlu0 %v1327
          %v1329 = vpop.xlane.xlu0 %1328
          %v1330 = vsel %vm1322, %v1164, 0.0
          %v1331 = vsel %vm1322, %v1259, 0.0
          %v1332 = vadd.f32 %v1330, %v1331
          %v1333 = vsel %vm1322, %v1165, 0.0
          %v1334 = vadd.f32 %v1332, %v1333
          %1335 = vadd.xlane.f32.xlu0 %v1334
          %v1336 = vpop.xlane.xlu0 %1335
          %v1337 = vsel %vm1322, %v1166, 0.0
          %v1338 = vsel %vm1322, %v1260, 0.0
          %v1339 = vadd.f32 %v1337, %v1338
          %v1340 = vsel %vm1322, %v1167, 0.0
          %v1341 = vadd.f32 %v1339, %v1340
          %1342 = vadd.xlane.f32.xlu0 %v1341
          %v1343 = vpop.xlane.xlu0 %1342
          %v1344 = vsel %vm1322, %v1168, 0.0
          %v1345 = vsel %vm1322, %v1261, 0.0
          %v1346 = vadd.f32 %v1344, %v1345
          %v1347 = vsel %vm1322, %v1169, 0.0
          %v1348 = vadd.f32 %v1346, %v1347
          %1349 = vadd.xlane.f32.xlu0 %v1348
          %v1350 = vpop.xlane.xlu0 %1349
          %v1351 = vsel %vm1322, %v1170, 0.0
          %v1352 = vsel %vm1322, %v1262, 0.0
          %v1353 = vadd.f32 %v1351, %v1352
          %v1354 = vsel %vm1322, %v1171, 0.0
          %v1355 = vadd.f32 %v1353, %v1354
          %1356 = vadd.xlane.f32.xlu0 %v1355
          %v1357 = vpop.xlane.xlu0 %1356
          %v1358 = vsel %vm1322, %v1172, 0.0
          %v1359 = vsel %vm1322, %v1263, 0.0
          %v1360 = vadd.f32 %v1358, %v1359
          %v1361 = vsel %vm1322, %v1173, 0.0
          %v1362 = vadd.f32 %v1360, %v1361
          %1363 = vadd.xlane.f32.xlu0 %v1362
          %v1364 = vpop.xlane.xlu0 %1363
          %v1365 = vsel %vm1322, %v1174, 0.0
          %v1366 = vsel %vm1322, %v1264, 0.0
          %v1367 = vadd.f32 %v1365, %v1366
          %v1368 = vsel %vm1322, %v1175, 0.0
          %v1369 = vadd.f32 %v1367, %v1368
          %1370 = vadd.xlane.f32.xlu0 %v1369
          %v1371 = vpop.xlane.xlu0 %1370
          %v1372 = vsel %vm1322, %v1176, 0.0
          %v1373 = vsel %vm1322, %v1265, 0.0
          %v1374 = vadd.f32 %v1372, %v1373
          %v1375 = vsel %vm1322, %v1177, 0.0
          %v1376 = vadd.f32 %v1374, %v1375
          %1377 = vadd.xlane.f32.xlu0 %v1376
          %v1378 = vpop.xlane.xlu0 %1377
          %v1379 = vsel %vm1322, %v1178, 0.0
          %v1380 = vsel %vm1322, %v1266, 0.0
          %v1381 = vadd.f32 %v1379, %v1380
          %v1382 = vsel %vm1322, %v1179, 0.0
          %v1383 = vadd.f32 %v1381, %v1382
          %1384 = vadd.xlane.f32.xlu0 %v1383
          %v1385 = vpop.xlane.xlu0 %1384
          %v1386 = vsel %vm1322, %v1180, 0.0
          %v1387 = vsel %vm1322, %v1267, 0.0
          %v1388 = vadd.f32 %v1386, %v1387
          %v1389 = vsel %vm1322, %v1181, 0.0
          %v1390 = vadd.f32 %v1388, %v1389
          %1391 = vadd.xlane.f32.xlu0 %v1390
          %v1392 = vpop.xlane.xlu0 %1391
          %v1393 = vsel %vm1322, %v1182, 0.0
          %v1394 = vsel %vm1322, %v1268, 0.0
          %v1395 = vadd.f32 %v1393, %v1394
          %v1396 = vsel %vm1322, %v1183, 0.0
          %v1397 = vadd.f32 %v1395, %v1396
          %1398 = vadd.xlane.f32.xlu0 %v1397
          %v1399 = vpop.xlane.xlu0 %1398
          %v1400 = vsel %vm1322, %v1184, 0.0
          %v1401 = vsel %vm1322, %v1269, 0.0
          %v1402 = vadd.f32 %v1400, %v1401
          %v1403 = vsel %vm1322, %v1185, 0.0
          %v1404 = vadd.f32 %v1402, %v1403
          %1405 = vadd.xlane.f32.xlu0 %v1404
          %v1406 = vpop.xlane.xlu0 %1405
          %v1407 = vsel %vm1322, %v1186, 0.0
          %v1408 = vsel %vm1322, %v1270, 0.0
          %v1409 = vadd.f32 %v1407, %v1408
          %v1410 = vsel %vm1322, %v1187, 0.0
          %v1411 = vadd.f32 %v1409, %v1410
          %1412 = vadd.xlane.f32.xlu0 %v1411
          %v1413 = vpop.xlane.xlu0 %1412
          %v1414 = vsel %vm1322, %v1188, 0.0
          %v1415 = vsel %vm1322, %v1271, 0.0
          %v1416 = vadd.f32 %v1414, %v1415
          %v1417 = vsel %vm1322, %v1189, 0.0
          %v1418 = vadd.f32 %v1416, %v1417
          %1419 = vadd.xlane.f32.xlu0 %v1418
          %v1420 = vpop.xlane.xlu0 %1419
          %v1421 = vsel %vm1322, %v1190, 0.0
          %v1422 = vsel %vm1322, %v1272, 0.0
          %v1423 = vadd.f32 %v1421, %v1422
          %v1424 = vsel %vm1322, %v1191, 0.0
          %v1425 = vadd.f32 %v1423, %v1424
          %1426 = vadd.xlane.f32.xlu0 %v1425
          %v1427 = vpop.xlane.xlu0 %1426
          %v1428 = vsel %vm1322, %v1192, 0.0
          %v1429 = vsel %vm1322, %v1273, 0.0
          %v1430 = vadd.f32 %v1428, %v1429
          %v1431 = vsel %vm1322, %v1193, 0.0
          %v1432 = vadd.f32 %v1430, %v1431
          %1433 = vadd.xlane.f32.xlu0 %v1432
          %v1434 = vpop.xlane.xlu0 %1433
          %v1435 = vsel %vm1322, %v1194, 0.0
          %v1436 = vsel %vm1322, %v1274, 0.0
          %v1437 = vadd.f32 %v1435, %v1436
          %v1438 = vsel %vm1322, %v1195, 0.0
          %v1439 = vadd.f32 %v1437, %v1438
          %1440 = vadd.xlane.f32.xlu0 %v1439
          %v1441 = vpop.xlane.xlu0 %1440
          %v1442 = vsel %vm1322, %v1196, 0.0
          %v1443 = vsel %vm1322, %v1275, 0.0
          %v1444 = vadd.f32 %v1442, %v1443
          %v1445 = vsel %vm1322, %v1197, 0.0
          %v1446 = vadd.f32 %v1444, %v1445
          %1447 = vadd.xlane.f32.xlu0 %v1446
          %v1448 = vpop.xlane.xlu0 %1447
          %v1449 = vsel %vm1322, %v1198, 0.0
          %v1450 = vsel %vm1322, %v1276, 0.0
          %v1451 = vadd.f32 %v1449, %v1450
          %v1452 = vsel %vm1322, %v1199, 0.0
          %v1453 = vadd.f32 %v1451, %v1452
          %1454 = vadd.xlane.f32.xlu0 %v1453
          %v1455 = vpop.xlane.xlu0 %1454
          %v1456 = vsel %vm1322, %v1200, 0.0
          %v1457 = vsel %vm1322, %v1277, 0.0
          %v1458 = vadd.f32 %v1456, %v1457
          %v1459 = vsel %vm1322, %v1201, 0.0
          %v1460 = vadd.f32 %v1458, %v1459
          %1461 = vadd.xlane.f32.xlu0 %v1460
          %v1462 = vpop.xlane.xlu0 %1461
          %v1463 = vsel %vm1322, %v1202, 0.0
          %v1464 = vsel %vm1322, %v1278, 0.0
          %v1465 = vadd.f32 %v1463, %v1464
          %v1466 = vsel %vm1322, %v1203, 0.0
          %v1467 = vadd.f32 %v1465, %v1466
          %1468 = vadd.xlane.f32.xlu0 %v1467
          %v1469 = vpop.xlane.xlu0 %1468
          %v1470 = vsel %vm1322, %v1204, 0.0
          %v1471 = vsel %vm1322, %v1279, 0.0
          %v1472 = vadd.f32 %v1470, %v1471
          %v1473 = vsel %vm1322, %v1205, 0.0
          %v1474 = vadd.f32 %v1472, %v1473
          %1475 = vadd.xlane.f32.xlu0 %v1474
          %v1476 = vpop.xlane.xlu0 %1475
          %v1477 = vsel %vm1322, %v1206, 0.0
          %v1478 = vsel %vm1322, %v1280, 0.0
          %v1479 = vadd.f32 %v1477, %v1478
          %v1480 = vsel %vm1322, %v1207, 0.0
          %v1481 = vadd.f32 %v1479, %v1480
          %1482 = vadd.xlane.f32.xlu0 %v1481
          %v1483 = vpop.xlane.xlu0 %1482
          %v1484 = vsel %vm1322, %v1208, 0.0
          %v1485 = vsel %vm1322, %v1281, 0.0
          %v1486 = vadd.f32 %v1484, %v1485
          %v1487 = vsel %vm1322, %v1209, 0.0
          %v1488 = vadd.f32 %v1486, %v1487
          %1489 = vadd.xlane.f32.xlu0 %v1488
          %v1490 = vpop.xlane.xlu0 %1489
          %v1491 = vsel %vm1322, %v1210, 0.0
          %v1492 = vsel %vm1322, %v1282, 0.0
          %v1493 = vadd.f32 %v1491, %v1492
          %v1494 = vsel %vm1322, %v1211, 0.0
          %v1495 = vadd.f32 %v1493, %v1494
          %1496 = vadd.xlane.f32.xlu0 %v1495
          %v1497 = vpop.xlane.xlu0 %1496
          %v1498 = vsel %vm1322, %v1212, 0.0
          %v1499 = vsel %vm1322, %v1283, 0.0
          %v1500 = vadd.f32 %v1498, %v1499
          %v1501 = vsel %vm1322, %v1213, 0.0
          %v1502 = vadd.f32 %v1500, %v1501
          %1503 = vadd.xlane.f32.xlu0 %v1502
          %v1504 = vpop.xlane.xlu0 %1503
          %v1505 = vsel %vm1322, %v1214, 0.0
          %v1506 = vsel %vm1322, %v1284, 0.0
          %v1507 = vadd.f32 %v1505, %v1506
          %v1508 = vsel %vm1322, %v1215, 0.0
          %v1509 = vadd.f32 %v1507, %v1508
          %1510 = vadd.xlane.f32.xlu0 %v1509
          %v1511 = vpop.xlane.xlu0 %1510
          %v1512 = vsel %vm1322, %v1216, 0.0
          %v1513 = vsel %vm1322, %v1285, 0.0
          %v1514 = vadd.f32 %v1512, %v1513
          %v1515 = vsel %vm1322, %v1217, 0.0
          %v1516 = vadd.f32 %v1514, %v1515
          %1517 = vadd.xlane.f32.xlu0 %v1516
          %v1518 = vpop.xlane.xlu0 %1517
          %v1519 = vsel %vm1322, %v1218, 0.0
          %v1520 = vsel %vm1322, %v1286, 0.0
          %v1521 = vadd.f32 %v1519, %v1520
          %v1522 = vsel %vm1322, %v1219, 0.0
          %v1523 = vadd.f32 %v1521, %v1522
          %1524 = vadd.xlane.f32.xlu0 %v1523
          %v1525 = vpop.xlane.xlu0 %1524
          %v1526 = vsel %vm1322, %v1220, 0.0
          %v1527 = vsel %vm1322, %v1287, 0.0
          %v1528 = vadd.f32 %v1526, %v1527
          %v1529 = vsel %vm1322, %v1221, 0.0
          %v1530 = vadd.f32 %v1528, %v1529
          %1531 = vadd.xlane.f32.xlu0 %v1530
          %v1532 = vpop.xlane.xlu0 %1531
          %v1533 = vsel %vm1322, %v1222, 0.0
          %v1534 = vsel %vm1322, %v1288, 0.0
          %v1535 = vadd.f32 %v1533, %v1534
          %v1536 = vsel %vm1322, %v1223, 0.0
          %v1537 = vadd.f32 %v1535, %v1536
          %1538 = vadd.xlane.f32.xlu0 %v1537
          %v1539 = vpop.xlane.xlu0 %1538
          %v1540 = vsel %vm1322, %v1224, 0.0
          %v1541 = vsel %vm1322, %v1289, 0.0
          %v1542 = vadd.f32 %v1540, %v1541
          %v1543 = vsel %vm1322, %v1225, 0.0
          %v1544 = vadd.f32 %v1542, %v1543
          %1545 = vadd.xlane.f32.xlu0 %v1544
          %v1546 = vpop.xlane.xlu0 %1545
          %v1547 = vmul.f32 %v1329, 0.0033333334
          %v1548 = vmul.f32 %v1336, 0.0033333334
          %v1549 = vmul.f32 %v1343, 0.0033333334
          %v1550 = vmul.f32 %v1350, 0.0033333334
          %v1551 = vmul.f32 %v1357, 0.0033333334
          %v1552 = vmul.f32 %v1364, 0.0033333334
          %v1553 = vmul.f32 %v1371, 0.0033333334
          %v1554 = vmul.f32 %v1378, 0.0033333334
          %v1555 = vmul.f32 %v1385, 0.0033333334
          %v1556 = vmul.f32 %v1392, 0.0033333334
          %v1557 = vmul.f32 %v1399, 0.0033333334
          %v1558 = vmul.f32 %v1406, 0.0033333334
          %v1559 = vmul.f32 %v1413, 0.0033333334
          %v1560 = vmul.f32 %v1420, 0.0033333334
          %v1561 = vmul.f32 %v1427, 0.0033333334
          %v1562 = vmul.f32 %v1434, 0.0033333334
          %v1563 = vmul.f32 %v1441, 0.0033333334
          %v1564 = vmul.f32 %v1448, 0.0033333334
          %v1565 = vmul.f32 %v1455, 0.0033333334
          %v1566 = vmul.f32 %v1462, 0.0033333334
          %v1567 = vmul.f32 %v1469, 0.0033333334
          %v1568 = vmul.f32 %v1476, 0.0033333334
          %v1569 = vmul.f32 %v1483, 0.0033333334
          %v1570 = vmul.f32 %v1490, 0.0033333334
          %v1571 = vmul.f32 %v1497, 0.0033333334
          %v1572 = vmul.f32 %v1504, 0.0033333334
          %v1573 = vmul.f32 %v1511, 0.0033333334
          %v1574 = vmul.f32 %v1518, 0.0033333334
          %v1575 = vmul.f32 %v1525, 0.0033333334
          %v1576 = vmul.f32 %v1532, 0.0033333334
          %v1577 = vmul.f32 %v1539, 0.0033333334
          %v1578 = vmul.f32 %v1546, 0.0033333334
          %v1579 = vstv %s447
          %v1580 = vadd.s32 %v1579, 1
          %v1581 = vld [vmem:[%s380] sm:$0xf]
          %v1582 = vld [vmem:[%s380 + $0x4] sm:$0xf]
          %v1583 = vld [vmem:[%s380 + $0x8] sm:$0xf]
          %v1584 = vld [vmem:[%s380 + $0xc] sm:$0xf]
          %v1585 = vld [vmem:[%s380 + $0x10] sm:$0xf]
          %v1586 = vld [vmem:[%s380 + $0x14] sm:$0xf]
          %v1587 = vld [vmem:[%s380 + $0x18] sm:$0xf]
          %v1588 = vld [vmem:[%s380 + $0x1c] sm:$0xf]
          %vm1589 = vcmp.eq.s32.totalorder %v1581, 1
          %vm1590 = vcmp.eq.s32.totalorder %v1582, 1
          %vm1591 = vcmp.eq.s32.totalorder %v1583, 1
          %vm1592 = vcmp.eq.s32.totalorder %v1584, 1
          %vm1593 = vcmp.eq.s32.totalorder %v1585, 1
          %vm1594 = vcmp.eq.s32.totalorder %v1586, 1
          %vm1595 = vcmp.eq.s32.totalorder %v1587, 1
          %vm1596 = vcmp.eq.s32.totalorder %v1588, 1
          %v1597 = vstv %s446
          %vm1598 = vcmp.lt.s32.totalorder %v1579, %v1597
          %vm1599 = vcmp.lt.s32.totalorder %v1580, %v1597
          %vm1600 = vmand %vm1589, %vm1598
          %vm1601 = vmand %vm1590, %vm1598
          %vm1602 = vmand %vm1591, %vm1598
          %vm1603 = vmand %vm1592, %vm1598
          %vm1604 = vmand %vm1593, %vm1599
          %vm1605 = vmand %vm1594, %vm1599
          %vm1606 = vmand %vm1595, %vm1599
          %vm1607 = vmand %vm1596, %vm1599
          %v1608 = vld [vmem:[%s434] sm:$0x1]
          %v1641 = vlaneseq
          %v1642 = vand.u32 %v1641, 127
          %v1643 = vlaneseq
          %v1644 = vshrl.u32 %v1643, 7
          %v1645 = vsub.s32 %v1642, %v1644
          %v1646 = vrot.slane %v1547, %v1645
          %v1647 = vlaneseq
          %v1648 = vshrl.u32 %v1647, 7
          %v1649 = vsub.s32 %v1642, %v1648
          %v1650 = vrot.slane %v1548, %v1649
          %v1651 = vlaneseq
          %v1652 = vshrl.u32 %v1651, 7
          %v1653 = vsub.s32 %v1642, %v1652
          %v1654 = vrot.slane %v1549, %v1653
          %v1655 = vlaneseq
          %v1656 = vshrl.u32 %v1655, 7
          %v1657 = vsub.s32 %v1642, %v1656
          %v1658 = vrot.slane %v1550, %v1657
          %v1659 = vlaneseq
          %v1660 = vshrl.u32 %v1659, 7
          %v1661 = vsub.s32 %v1642, %v1660
          %v1662 = vrot.slane %v1551, %v1661
          %v1663 = vlaneseq
          %v1664 = vshrl.u32 %v1663, 7
          %v1665 = vsub.s32 %v1642, %v1664
          %v1666 = vrot.slane %v1552, %v1665
          %v1667 = vlaneseq
          %v1668 = vshrl.u32 %v1667, 7
          %v1669 = vsub.s32 %v1642, %v1668
          %v1670 = vrot.slane %v1553, %v1669
          %v1671 = vlaneseq
          %v1672 = vshrl.u32 %v1671, 7
          %v1673 = vsub.s32 %v1642, %v1672
          %v1674 = vrot.slane %v1554, %v1673
          %v1675 = vlaneseq
          %v1676 = vshrl.u32 %v1675, 7
          %v1677 = vsub.s32 %v1642, %v1676
          %v1678 = vrot.slane %v1555, %v1677
          %v1679 = vlaneseq
          %v1680 = vshrl.u32 %v1679, 7
          %v1681 = vsub.s32 %v1642, %v1680
          %v1682 = vrot.slane %v1556, %v1681
          %v1683 = vlaneseq
          %v1684 = vshrl.u32 %v1683, 7
          %v1685 = vsub.s32 %v1642, %v1684
          %v1686 = vrot.slane %v1557, %v1685
          %v1687 = vlaneseq
          %v1688 = vshrl.u32 %v1687, 7
          %v1689 = vsub.s32 %v1642, %v1688
          %v1690 = vrot.slane %v1558, %v1689
          %v1691 = vlaneseq
          %v1692 = vshrl.u32 %v1691, 7
          %v1693 = vsub.s32 %v1642, %v1692
          %v1694 = vrot.slane %v1559, %v1693
          %v1695 = vlaneseq
          %v1696 = vshrl.u32 %v1695, 7
          %v1697 = vsub.s32 %v1642, %v1696
          %v1698 = vrot.slane %v1560, %v1697
          %v1699 = vlaneseq
          %v1700 = vshrl.u32 %v1699, 7
          %v1701 = vsub.s32 %v1642, %v1700
          %v1702 = vrot.slane %v1561, %v1701
          %v1703 = vlaneseq
          %v1704 = vshrl.u32 %v1703, 7
          %v1705 = vsub.s32 %v1642, %v1704
          %v1706 = vrot.slane %v1562, %v1705
          %v1707 = vlaneseq
          %v1708 = vshrl.u32 %v1707, 7
          %v1709 = vsub.s32 %v1642, %v1708
          %v1710 = vrot.slane %v1563, %v1709
          %v1711 = vlaneseq
          %v1712 = vshrl.u32 %v1711, 7
          %v1713 = vsub.s32 %v1642, %v1712
          %v1714 = vrot.slane %v1564, %v1713
          %v1715 = vlaneseq
          %v1716 = vshrl.u32 %v1715, 7
          %v1717 = vsub.s32 %v1642, %v1716
          %v1718 = vrot.slane %v1565, %v1717
          %v1719 = vlaneseq
          %v1720 = vshrl.u32 %v1719, 7
          %v1721 = vsub.s32 %v1642, %v1720
          %v1722 = vrot.slane %v1566, %v1721
          %v1723 = vlaneseq
          %v1724 = vshrl.u32 %v1723, 7
          %v1725 = vsub.s32 %v1642, %v1724
          %v1726 = vrot.slane %v1567, %v1725
          %v1727 = vlaneseq
          %v1728 = vshrl.u32 %v1727, 7
          %v1729 = vsub.s32 %v1642, %v1728
          %v1730 = vrot.slane %v1568, %v1729
          %v1731 = vlaneseq
          %v1732 = vshrl.u32 %v1731, 7
          %v1733 = vsub.s32 %v1642, %v1732
          %v1734 = vrot.slane %v1569, %v1733
          %v1735 = vlaneseq
          %v1736 = vshrl.u32 %v1735, 7
          %v1737 = vsub.s32 %v1642, %v1736
          %v1738 = vrot.slane %v1570, %v1737
          %v1739 = vlaneseq
          %v1740 = vshrl.u32 %v1739, 7
          %v1741 = vsub.s32 %v1642, %v1740
          %v1742 = vrot.slane %v1571, %v1741
          %v1743 = vlaneseq
          %v1744 = vshrl.u32 %v1743, 7
          %v1745 = vsub.s32 %v1642, %v1744
          %v1746 = vrot.slane %v1572, %v1745
          %v1747 = vlaneseq
          %v1748 = vshrl.u32 %v1747, 7
          %v1749 = vsub.s32 %v1642, %v1748
          %v1750 = vrot.slane %v1573, %v1749
          %v1751 = vlaneseq
          %v1752 = vshrl.u32 %v1751, 7
          %v1753 = vsub.s32 %v1642, %v1752
          %v1754 = vrot.slane %v1574, %v1753
          %v1755 = vlaneseq
          %v1756 = vshrl.u32 %v1755, 7
          %v1757 = vsub.s32 %v1642, %v1756
          %v1758 = vrot.slane %v1575, %v1757
          %v1759 = vlaneseq
          %v1760 = vshrl.u32 %v1759, 7
          %v1761 = vsub.s32 %v1642, %v1760
          %v1762 = vrot.slane %v1576, %v1761
          %v1763 = vlaneseq
          %v1764 = vshrl.u32 %v1763, 7
          %v1765 = vsub.s32 %v1642, %v1764
          %v1766 = vrot.slane %v1577, %v1765
          %v1767 = vlaneseq
          %v1768 = vshrl.u32 %v1767, 7
          %v1769 = vsub.s32 %v1642, %v1768
          %v1770 = vrot.slane %v1578, %v1769
          %vm1771 = vcmask 1041409
          %v1772 = vsel %vm1771, %v1650, %v1646
          %vm1773 = vcmask 1042434
          %v1774 = vsel %vm1773, %v1654, %v1772
          %vm1775 = vcmask 1043459
          %v1776 = vsel %vm1775, %v1658, %v1774
          %v1777 = vsel %vm1771, %v1666, %v1662
          %v1778 = vsel %vm1773, %v1670, %v1777
          %v1779 = vsel %vm1775, %v1674, %v1778
          %v1780 = vsel %vm1771, %v1682, %v1678
          %v1781 = vsel %vm1773, %v1686, %v1780
          %v1782 = vsel %vm1775, %v1690, %v1781
          %v1783 = vsel %vm1771, %v1698, %v1694
          %v1784 = vsel %vm1773, %v1702, %v1783
          %v1785 = vsel %vm1775, %v1706, %v1784
          %v1786 = vsel %vm1771, %v1714, %v1710
          %v1787 = vsel %vm1773, %v1718, %v1786
          %v1788 = vsel %vm1775, %v1722, %v1787
          %v1789 = vsel %vm1771, %v1730, %v1726
          %v1790 = vsel %vm1773, %v1734, %v1789
          %v1791 = vsel %vm1775, %v1738, %v1790
          %v1792 = vsel %vm1771, %v1746, %v1742
          %v1793 = vsel %vm1773, %v1750, %v1792
          %v1794 = vsel %vm1775, %v1754, %v1793
          %v1795 = vsel %vm1771, %v1762, %v1758
          %v1796 = vsel %vm1773, %v1766, %v1795
          %v1797 = vsel %vm1775, %v1770, %v1796
          %v1806 = vsel %vm1600, %v1776, 0.0
          %v1807 = vsel %vm1601, %v1779, 0.0
          %v1808 = vsel %vm1602, %v1782, 0.0
          %v1809 = vsel %vm1603, %v1785, 0.0
          %v1810 = vsel %vm1604, %v1788, 0.0
          %v1811 = vsel %vm1605, %v1791, 0.0
          %v1812 = vsel %vm1606, %v1794, 0.0
          %v1813 = vsel %vm1607, %v1797, 0.0
          %vm1814 = vcmask 27648
          %v1815 = vsel %vm1814, %v1806, 0.0
          %v1816 = vsel %vm1814, %v1807, 0.0
          %v1817 = vadd.f32 %v1815, %v1816
          %v1818 = vsel %vm1814, %v1808, 0.0
          %v1819 = vadd.f32 %v1817, %v1818
          %v1820 = vsel %vm1814, %v1809, 0.0
          %v1821 = vadd.f32 %v1819, %v1820
          %v1822 = vsel %vm1814, %v1810, 0.0
          %v1823 = vadd.f32 %v1821, %v1822
          %v1824 = vsel %vm1814, %v1811, 0.0
          %v1825 = vadd.f32 %v1823, %v1824
          %v1826 = vsel %vm1814, %v1812, 0.0
          %v1827 = vadd.f32 %v1825, %v1826
          %v1828 = vsel %vm1814, %v1813, 0.0
          %v1829 = vadd.f32 %v1827, %v1828
          %1830 = vadd.xlane.f32.xlu0 %v1829
          %v1831 = vpop.xlane.xlu0 %1830
          %v1832 = vrot.slane %v1831, 4
          %v1833 = vadd.f32 %v1831, %v1832
          %v1834 = vrot.slane %v1833, 2
          %v1835 = vadd.f32 %v1833, %v1834
          %v1836 = vrot.slane %v1835, 1
          %v1837 = vadd.f32 %v1835, %v1836
          %s1838 = vtos %v1837
          %v1839 = vstv %s1838
          %v1840 = vadd.f32 %v1608, %v1839
          %vm1841 = vcmask 0
          %1842 = vst.msk [vmem:[%s434] sm:$0x1] %vm1841, %v1840
          %v1843 = vld [vmem:[%s437] sm:$0x1]
          %vm1844 = vcmp.gt.f32.partialorder %v1547, 0.0
          %vm1845 = vcmp.gt.f32.partialorder %v1548, 0.0
          %vm1846 = vcmp.gt.f32.partialorder %v1549, 0.0
          %vm1847 = vcmp.gt.f32.partialorder %v1550, 0.0
          %vm1848 = vcmp.gt.f32.partialorder %v1551, 0.0
          %vm1849 = vcmp.gt.f32.partialorder %v1552, 0.0
          %vm1850 = vcmp.gt.f32.partialorder %v1553, 0.0
          %vm1851 = vcmp.gt.f32.partialorder %v1554, 0.0
          %vm1852 = vcmp.gt.f32.partialorder %v1555, 0.0
          %vm1853 = vcmp.gt.f32.partialorder %v1556, 0.0
          %vm1854 = vcmp.gt.f32.partialorder %v1557, 0.0
          %vm1855 = vcmp.gt.f32.partialorder %v1558, 0.0
          %vm1856 = vcmp.gt.f32.partialorder %v1559, 0.0
          %vm1857 = vcmp.gt.f32.partialorder %v1560, 0.0
          %vm1858 = vcmp.gt.f32.partialorder %v1561, 0.0
          %vm1859 = vcmp.gt.f32.partialorder %v1562, 0.0
          %vm1860 = vcmp.gt.f32.partialorder %v1563, 0.0
          %vm1861 = vcmp.gt.f32.partialorder %v1564, 0.0
          %vm1862 = vcmp.gt.f32.partialorder %v1565, 0.0
          %vm1863 = vcmp.gt.f32.partialorder %v1566, 0.0
          %vm1864 = vcmp.gt.f32.partialorder %v1567, 0.0
          %vm1865 = vcmp.gt.f32.partialorder %v1568, 0.0
          %vm1866 = vcmp.gt.f32.partialorder %v1569, 0.0
          %vm1867 = vcmp.gt.f32.partialorder %v1570, 0.0
          %vm1868 = vcmp.gt.f32.partialorder %v1571, 0.0
          %vm1869 = vcmp.gt.f32.partialorder %v1572, 0.0
          %vm1870 = vcmp.gt.f32.partialorder %v1573, 0.0
          %vm1871 = vcmp.gt.f32.partialorder %v1574, 0.0
          %vm1872 = vcmp.gt.f32.partialorder %v1575, 0.0
          %vm1873 = vcmp.gt.f32.partialorder %v1576, 0.0
          %vm1874 = vcmp.gt.f32.partialorder %v1577, 0.0
          %vm1875 = vcmp.gt.f32.partialorder %v1578, 0.0
          %v1876 = vsel %vm1844, 1, 0
          %v1877 = vsel %vm1845, 1, 0
          %v1878 = vsel %vm1846, 1, 0
          %v1879 = vsel %vm1847, 1, 0
          %v1880 = vsel %vm1848, 1, 0
          %v1881 = vsel %vm1849, 1, 0
          %v1882 = vsel %vm1850, 1, 0
          %v1883 = vsel %vm1851, 1, 0
          %v1884 = vsel %vm1852, 1, 0
          %v1885 = vsel %vm1853, 1, 0
          %v1886 = vsel %vm1854, 1, 0
          %v1887 = vsel %vm1855, 1, 0
          %v1888 = vsel %vm1856, 1, 0
          %v1889 = vsel %vm1857, 1, 0
          %v1890 = vsel %vm1858, 1, 0
          %v1891 = vsel %vm1859, 1, 0
          %v1892 = vsel %vm1860, 1, 0
          %v1893 = vsel %vm1861, 1, 0
          %v1894 = vsel %vm1862, 1, 0
          %v1895 = vsel %vm1863, 1, 0
          %v1896 = vsel %vm1864, 1, 0
          %v1897 = vsel %vm1865, 1, 0
          %v1898 = vsel %vm1866, 1, 0
          %v1899 = vsel %vm1867, 1, 0
          %v1900 = vsel %vm1868, 1, 0
          %v1901 = vsel %vm1869, 1, 0
          %v1902 = vsel %vm1870, 1, 0
          %v1903 = vsel %vm1871, 1, 0
          %v1904 = vsel %vm1872, 1, 0
          %v1905 = vsel %vm1873, 1, 0
          %v1906 = vsel %vm1874, 1, 0
          %v1907 = vsel %vm1875, 1, 0
          %v1908 = vlaneseq
          %v1909 = vshrl.u32 %v1908, 7
          %v1910 = vsub.s32 %v1642, %v1909
          %v1911 = vrot.slane %v1876, %v1910
          %v1912 = vlaneseq
          %v1913 = vshrl.u32 %v1912, 7
          %v1914 = vsub.s32 %v1642, %v1913
          %v1915 = vrot.slane %v1877, %v1914
          %v1916 = vlaneseq
          %v1917 = vshrl.u32 %v1916, 7
          %v1918 = vsub.s32 %v1642, %v1917
          %v1919 = vrot.slane %v1878, %v1918
          %v1920 = vlaneseq
          %v1921 = vshrl.u32 %v1920, 7
          %v1922 = vsub.s32 %v1642, %v1921
          %v1923 = vrot.slane %v1879, %v1922
          %v1924 = vlaneseq
          %v1925 = vshrl.u32 %v1924, 7
          %v1926 = vsub.s32 %v1642, %v1925
          %v1927 = vrot.slane %v1880, %v1926
          %v1928 = vlaneseq
          %v1929 = vshrl.u32 %v1928, 7
          %v1930 = vsub.s32 %v1642, %v1929
          %v1931 = vrot.slane %v1881, %v1930
          %v1932 = vlaneseq
          %v1933 = vshrl.u32 %v1932, 7
          %v1934 = vsub.s32 %v1642, %v1933
          %v1935 = vrot.slane %v1882, %v1934
          %v1936 = vlaneseq
          %v1937 = vshrl.u32 %v1936, 7
          %v1938 = vsub.s32 %v1642, %v1937
          %v1939 = vrot.slane %v1883, %v1938
          %v1940 = vlaneseq
          %v1941 = vshrl.u32 %v1940, 7
          %v1942 = vsub.s32 %v1642, %v1941
          %v1943 = vrot.slane %v1884, %v1942
          %v1944 = vlaneseq
          %v1945 = vshrl.u32 %v1944, 7
          %v1946 = vsub.s32 %v1642, %v1945
          %v1947 = vrot.slane %v1885, %v1946
          %v1948 = vlaneseq
          %v1949 = vshrl.u32 %v1948, 7
          %v1950 = vsub.s32 %v1642, %v1949
          %v1951 = vrot.slane %v1886, %v1950
          %v1952 = vlaneseq
          %v1953 = vshrl.u32 %v1952, 7
          %v1954 = vsub.s32 %v1642, %v1953
          %v1955 = vrot.slane %v1887, %v1954
          %v1956 = vlaneseq
          %v1957 = vshrl.u32 %v1956, 7
          %v1958 = vsub.s32 %v1642, %v1957
          %v1959 = vrot.slane %v1888, %v1958
          %v1960 = vlaneseq
          %v1961 = vshrl.u32 %v1960, 7
          %v1962 = vsub.s32 %v1642, %v1961
          %v1963 = vrot.slane %v1889, %v1962
          %v1964 = vlaneseq
          %v1965 = vshrl.u32 %v1964, 7
          %v1966 = vsub.s32 %v1642, %v1965
          %v1967 = vrot.slane %v1890, %v1966
          %v1968 = vlaneseq
          %v1969 = vshrl.u32 %v1968, 7
          %v1970 = vsub.s32 %v1642, %v1969
          %v1971 = vrot.slane %v1891, %v1970
          %v1972 = vlaneseq
          %v1973 = vshrl.u32 %v1972, 7
          %v1974 = vsub.s32 %v1642, %v1973
          %v1975 = vrot.slane %v1892, %v1974
          %v1976 = vlaneseq
          %v1977 = vshrl.u32 %v1976, 7
          %v1978 = vsub.s32 %v1642, %v1977
          %v1979 = vrot.slane %v1893, %v1978
          %v1980 = vlaneseq
          %v1981 = vshrl.u32 %v1980, 7
          %v1982 = vsub.s32 %v1642, %v1981
          %v1983 = vrot.slane %v1894, %v1982
          %v1984 = vlaneseq
          %v1985 = vshrl.u32 %v1984, 7
          %v1986 = vsub.s32 %v1642, %v1985
          %v1987 = vrot.slane %v1895, %v1986
          %v1988 = vlaneseq
          %v1989 = vshrl.u32 %v1988, 7
          %v1990 = vsub.s32 %v1642, %v1989
          %v1991 = vrot.slane %v1896, %v1990
          %v1992 = vlaneseq
          %v1993 = vshrl.u32 %v1992, 7
          %v1994 = vsub.s32 %v1642, %v1993
          %v1995 = vrot.slane %v1897, %v1994
          %v1996 = vlaneseq
          %v1997 = vshrl.u32 %v1996, 7
          %v1998 = vsub.s32 %v1642, %v1997
          %v1999 = vrot.slane %v1898, %v1998
          %v2000 = vlaneseq
          %v2001 = vshrl.u32 %v2000, 7
          %v2002 = vsub.s32 %v1642, %v2001
          %v2003 = vrot.slane %v1899, %v2002
          %v2004 = vlaneseq
          %v2005 = vshrl.u32 %v2004, 7
          %v2006 = vsub.s32 %v1642, %v2005
          %v2007 = vrot.slane %v1900, %v2006
          %v2008 = vlaneseq
          %v2009 = vshrl.u32 %v2008, 7
          %v2010 = vsub.s32 %v1642, %v2009
          %v2011 = vrot.slane %v1901, %v2010
          %v2012 = vlaneseq
          %v2013 = vshrl.u32 %v2012, 7
          %v2014 = vsub.s32 %v1642, %v2013
          %v2015 = vrot.slane %v1902, %v2014
          %v2016 = vlaneseq
          %v2017 = vshrl.u32 %v2016, 7
          %v2018 = vsub.s32 %v1642, %v2017
          %v2019 = vrot.slane %v1903, %v2018
          %v2020 = vlaneseq
          %v2021 = vshrl.u32 %v2020, 7
          %v2022 = vsub.s32 %v1642, %v2021
          %v2023 = vrot.slane %v1904, %v2022
          %v2024 = vlaneseq
          %v2025 = vshrl.u32 %v2024, 7
          %v2026 = vsub.s32 %v1642, %v2025
          %v2027 = vrot.slane %v1905, %v2026
          %v2028 = vlaneseq
          %v2029 = vshrl.u32 %v2028, 7
          %v2030 = vsub.s32 %v1642, %v2029
          %v2031 = vrot.slane %v1906, %v2030
          %v2032 = vlaneseq
          %v2033 = vshrl.u32 %v2032, 7
          %v2034 = vsub.s32 %v1642, %v2033
          %v2035 = vrot.slane %v1907, %v2034
          %v2036 = vsel %vm1771, %v1915, %v1911
          %v2037 = vsel %vm1773, %v1919, %v2036
          %v2038 = vsel %vm1775, %v1923, %v2037
          %v2039 = vsel %vm1771, %v1931, %v1927
          %v2040 = vsel %vm1773, %v1935, %v2039
          %v2041 = vsel %vm1775, %v1939, %v2040
          %v2042 = vsel %vm1771, %v1947, %v1943
          %v2043 = vsel %vm1773, %v1951, %v2042
          %v2044 = vsel %vm1775, %v1955, %v2043
          %v2045 = vsel %vm1771, %v1963, %v1959
          %v2046 = vsel %vm1773, %v1967, %v2045
          %v2047 = vsel %vm1775, %v1971, %v2046
          %v2048 = vsel %vm1771, %v1979, %v1975
          %v2049 = vsel %vm1773, %v1983, %v2048
          %v2050 = vsel %vm1775, %v1987, %v2049
          %v2051 = vsel %vm1771, %v1995, %v1991
          %v2052 = vsel %vm1773, %v1999, %v2051
          %v2053 = vsel %vm1775, %v2003, %v2052
          %v2054 = vsel %vm1771, %v2011, %v2007
          %v2055 = vsel %vm1773, %v2015, %v2054
          %v2056 = vsel %vm1775, %v2019, %v2055
          %v2057 = vsel %vm1771, %v2027, %v2023
          %v2058 = vsel %vm1773, %v2031, %v2057
          %v2059 = vsel %vm1775, %v2035, %v2058
          %vm2060 = vcmp.ne.s32.totalorder %v2038, 0
          %vm2061 = vcmp.ne.s32.totalorder %v2041, 0
          %vm2062 = vcmp.ne.s32.totalorder %v2044, 0
          %vm2063 = vcmp.ne.s32.totalorder %v2047, 0
          %vm2064 = vcmp.ne.s32.totalorder %v2050, 0
          %vm2065 = vcmp.ne.s32.totalorder %v2053, 0
          %vm2066 = vcmp.ne.s32.totalorder %v2056, 0
          %vm2067 = vcmp.ne.s32.totalorder %v2059, 0
          %vm2068 = vmand %vm1600, %vm2060
          %vm2069 = vmand %vm1601, %vm2061
          %vm2070 = vmand %vm1602, %vm2062
          %vm2071 = vmand %vm1603, %vm2063
          %vm2072 = vmand %vm1604, %vm2064
          %vm2073 = vmand %vm1605, %vm2065
          %vm2074 = vmand %vm1606, %vm2066
          %vm2075 = vmand %vm1607, %vm2067
          %v2076 = vsel %vm2068, 1.0, 0.0
          %v2077 = vsel %vm2069, 1.0, 0.0
          %v2078 = vsel %vm2070, 1.0, 0.0
          %v2079 = vsel %vm2071, 1.0, 0.0
          %v2080 = vsel %vm2072, 1.0, 0.0
          %v2081 = vsel %vm2073, 1.0, 0.0
          %v2082 = vsel %vm2074, 1.0, 0.0
          %v2083 = vsel %vm2075, 1.0, 0.0
          %v2084 = vsel %vm1814, %v2076, 0.0
          %v2085 = vsel %vm1814, %v2077, 0.0
          %v2086 = vadd.f32 %v2084, %v2085
          %v2087 = vsel %vm1814, %v2078, 0.0
          %v2088 = vadd.f32 %v2086, %v2087
          %v2089 = vsel %vm1814, %v2079, 0.0
          %v2090 = vadd.f32 %v2088, %v2089
          %v2091 = vsel %vm1814, %v2080, 0.0
          %v2092 = vadd.f32 %v2090, %v2091
          %v2093 = vsel %vm1814, %v2081, 0.0
          %v2094 = vadd.f32 %v2092, %v2093
          %v2095 = vsel %vm1814, %v2082, 0.0
          %v2096 = vadd.f32 %v2094, %v2095
          %v2097 = vsel %vm1814, %v2083, 0.0
          %v2098 = vadd.f32 %v2096, %v2097
          %2099 = vadd.xlane.f32.xlu0 %v2098
          %v2100 = vpop.xlane.xlu0 %2099
          %v2101 = vrot.slane %v2100, 4
          %v2102 = vadd.f32 %v2100, %v2101
          %v2103 = vrot.slane %v2102, 2
          %v2104 = vadd.f32 %v2102, %v2103
          %v2105 = vrot.slane %v2104, 1
          %v2106 = vadd.f32 %v2104, %v2105
          %s2107 = vtos %v2106
          %v2108 = vstv %s2107
          %v2109 = vadd.f32 %v1843, %v2108
          %2110 = vst.msk [vmem:[%s437] sm:$0x1] %vm1841, %v2109
        $region72: #{tpu_custom_call.1} parent=43 // pred_fallthru
          _
        %p2111 = scmp.lt.s32.totalorder %s35, 1
        %s2112 = scalar_select %p2111, %s35, 1
        %s2113 = scalar_lea.vmem %s7, %s2112
        %p2114 = scmp.lt.s32.totalorder %s35, 1
        %s2115 = scalar_select %p2114, %s35, 1
        %s2116 = scalar_lea.vmem %s8, %s2115
        // Predicated region
        $region73: #{tpu_custom_call.1} parent=43 // pred_check
          %p2117 = pneg %p208
        $region74: #{tpu_custom_call.1} parent=43 // pred_check_branch
          %2119 = sbr.rel (%p2117) target = $region76
        $region75: #{tpu_custom_call.1} parent=43 // pred_region
          _
        $region76: #{tpu_custom_call.1} parent=43 // pred_fallthru
          _
        // Predicated region
        $region77: #{tpu_custom_call.1} parent=43 // pred_check
          %p2120 = pneg %p234
        $region78: #{tpu_custom_call.1} parent=43 // pred_check_branch
          %2122 = sbr.rel (%p2120) target = $region80
        $region79: #{tpu_custom_call.1} parent=43 // pred_region
          _
        $region80: #{tpu_custom_call.1} parent=43 // pred_fallthru
          _
      $region44: #{tpu_custom_call.1} parent=5 // pred_fallthru
        _
      %p2123 = scmp.le.s32.totalorder 2, %s26
      // Predicated region
      $region81: #{tpu_custom_call.1} parent=5 // pred_check
        %p2124 = pneg %p2123
      $region82: #{tpu_custom_call.1} parent=5 // pred_check_branch
        %2126 = sbr.rel (%p2124) target = $region84
      $region83: #{tpu_custom_call.1} parent=5 // pred_region
        %s2127 = ssub.s32 %s26, 2
        // Predicated region
        $region85: #{tpu_custom_call.1} parent=83 // pred_check
          %p2128 = pneg %p214
        $region86: #{tpu_custom_call.1} parent=83 // pred_check_branch
          %2130 = sbr.rel (%p2128) target = $region88
        $region87: #{tpu_custom_call.1} parent=83 // pred_region
          %p2131 = scmp.lt.s32.totalorder %s37, 1
          %s2132 = scalar_select %p2131, %s37, 1
          %s2133 = scalar_lea.vmem %s7, %s2132
        $region88: #{tpu_custom_call.1} parent=83 // pred_fallthru
          _
        // Predicated region
        $region89: #{tpu_custom_call.1} parent=83 // pred_check
          %p2134 = pneg %p240
        $region90: #{tpu_custom_call.1} parent=83 // pred_check_branch
          %2136 = sbr.rel (%p2134) target = $region92
        $region91: #{tpu_custom_call.1} parent=83 // pred_region
          %p2137 = scmp.lt.s32.totalorder %s37, 1
          %s2138 = scalar_select %p2137, %s37, 1
          %s2139 = scalar_lea.vmem %s8, %s2138
        $region92: #{tpu_custom_call.1} parent=83 // pred_fallthru
          _
      $region84: #{tpu_custom_call.1} parent=5 // pred_fallthru
        _
    $region6: #{tpu_custom_call.1} parent=1 // loop_footer
      %s30 = sadd.s32 1, %s26
    $region7: #{tpu_custom_call.1} parent=1 // loop_footer_branch
      %25 = sbr.rel target = $region3
    $region8: #{tpu_custom_call.1} parent=1 // loop_exit
      _
    %2140 = vsyncpa [#allocation5], 1
    %s2141 = scalar_lea.sflag [#allocation5], 1
    %2142 = vsyncpa %s2141, 1
    %2143 = vsyncpa [#allocation7], 1
    %s2144 = scalar_lea.sflag [#allocation7], 1
    %2145 = vsyncpa %s2144, 1
    %2146 = vsyncpa [#allocation10], 1

</llo_original>
